<compile_context>
chip_gen: v7x
topology: tpu7x:2x2x1
jax: 0.10.0
libtpu: 0.0.40
codegen_flags: <defaults>
</compile_context>

<pallas_src>
import functools

import jax
import jax.numpy as jnp
from jax.experimental import pallas as pl
from jax.experimental.pallas import tpu as pltpu

LANES = 128  # TPU vreg lane width


def _round_up(x, m):
    return (x + m - 1) // m * m


# ----------------------------------------------------------------------------
# Fused whole-network kernel.
#   xsh1_ref : (3, 2*rows_pad, K1)  bf16  per-kh shifted input rows; first
#              rows_pad rows are h-phase 0, next rows_pad rows are h-phase 1;
#              within a phase rows are (h2_pad, image) with zero pad rows.
#   bw1_ref  : (3, K1, 2*LANES)     bf16  banded conv1 weights (per kh tap)
#   b1_ref   : (1, LANES)           f32   conv1 bias tiled over (w2_pad, c1)
#   bw2_ref  : (3, LANES, 2*LANES)  bf16  banded conv2 weights
#   b2_ref   : (1, LANES)           f32   conv2 bias tiled over (w4, c2)
#   fc1w_ref : (h4, LANES, FEAT)    bf16  fc1 weight split per pooled-h row
#   fc2w_ref : (FEAT, FEAT)         bf16
#   clsw_ref : (FEAT, LANES)        bf16  classifier weight, classes padded
#   outputs  : xview (N, FEAT) f32, last (B, FEAT) f32, logits (B, LANES) f32
#   act2_ref : (rows_pad, LANES)    bf16  VMEM scratch: conv1 pooled output,
#              rows = (h2_pad, image) incl. zero padding rows/lanes.
# ----------------------------------------------------------------------------
def _mvcnn_kernel(xsh1_ref, bw1_ref, b1_ref, bw2_ref, b2_ref,
                  fc1w_ref, fc1b_ref, fc2w_ref, fc2b_ref, clsw_ref, clsb_ref,
                  xview_ref, last_ref, logit_ref, act2_ref,
                  *, n_img, batch, views, h2_blocks, h4_blocks, rows_pad):
    f32 = jnp.float32
    bf16 = jnp.bfloat16

    # ---- conv1: 3 banded matmuls (both h-pool phases stacked along rows) ----
    acc = jnp.zeros((2 * rows_pad, 2 * LANES), f32)
    for kh in range(3):
        acc = acc + jnp.dot(xsh1_ref[kh], bw1_ref[kh], preferred_element_type=f32)
    hp = jnp.maximum(acc[:rows_pad, :], acc[rows_pad:, :])      # 2x2 pool: h phase
    wp = jnp.maximum(hp[:, :LANES], hp[:, LANES:])              # 2x2 pool: w phase
    # bias only on interior rows so the h-padding rows of act2 stay exactly 0
    row = jax.lax.broadcasted_iota(jnp.int32, (rows_pad, 1), 0)
    interior = jnp.logical_and(row >= n_img, row < (h2_blocks + 1) * n_img)
    act2 = jnp.maximum(wp + interior.astype(f32) * b1_ref[...], 0.0)
    act2_ref[...] = act2.astype(bf16)        # rows=(h2_pad, img), lanes=(w2_pad, c1)

    # ---- conv2 + pool, fused with fc1 accumulation over pooled-h blocks ----
    h1 = jnp.zeros((n_img, LANES), f32)
    for h4 in range(h4_blocks):
        acc2 = jnp.zeros((2 * n_img, 2 * LANES), f32)
        for kh in range(3):
            # both h phases for this tap are two contiguous image blocks
            a = act2_ref[(2 * h4 + kh) * n_img:(2 * h4 + kh + 2) * n_img, :]
            acc2 = acc2 + jnp.dot(a, bw2_ref[kh], preferred_element_type=f32)
        hp2 = jnp.maximum(acc2[:n_img, :], acc2[n_img:, :])     # h-phase pool
        wp2 = jnp.maximum(hp2[:, :LANES], hp2[:, LANES:])       # w-phase pool
        feat = jnp.maximum(wp2 + b2_ref[...], 0.0)              # (N, 128) lanes (w4, c2)
        h1 = h1 + jnp.dot(feat.astype(bf16), fc1w_ref[h4], preferred_element_type=f32)

    # ---- fc1 bias/ReLU -> fc2+ReLU -> view max -> classifier ----
    h1 = jnp.maximum(h1 + fc1b_ref[...], 0.0)
    h2 = jnp.dot(h1.astype(bf16), fc2w_ref[...], preferred_element_type=f32)
    h2 = jnp.maximum(h2 + fc2b_ref[...], 0.0)                   # (N, FEAT)
    xview_ref[...] = h2
    last = jnp.concatenate(
        [jnp.max(h2[b * views:(b + 1) * views, :], axis=0, keepdims=True)
         for b in range(batch)], axis=0)                        # (B, FEAT)
    last_ref[...] = last
    logit_ref[...] = (jnp.dot(last.astype(bf16), clsw_ref[...],
                              preferred_element_type=f32) + clsb_ref[...])


# ----------------------------------------------------------------------------
# Wrapper-side prep (tiny XLA ops, no im2col duplication)
# ----------------------------------------------------------------------------
def _banded_conv_weight(w_hwio, in_w, out_pad, k_pad=None):
    """3x3 conv -> 3 banded matmul weights.

    Input lane index j = (padded_w_pos)*Cin + c (K = (in_w+2)*Cin, zero-padded
    to k_pad).  Output lane = phase_w*LANES + (w2 + off)*Cout + co, where
    w2 = pooled-w index, off = 1 if the output needs w-padding columns (feeds
    another conv) else 0; unused lanes are zero."""
    KH, KW, cin, cout = w_hwio.shape
    wp = in_w + 2
    w2n = in_w // 2
    off = cout if out_pad else 0
    assert off + w2n * cout <= LANES
    ii = jnp.arange(wp)[:, None, None]
    ph = jnp.arange(2)[None, :, None]
    jj = jnp.arange(w2n)[None, None, :]
    m = jnp.zeros((KH, wp, cin, 2, w2n, cout), jnp.float32)
    for kw in range(KW):
        sel = (ii == 2 * jj + ph + kw).astype(jnp.float32)      # (wp, 2, w2n)
        m = m + jnp.einsum('ipw,hcd->hicpwd', sel, w_hwio[:, kw].astype(jnp.float32))
    full = jnp.zeros((KH, wp, cin, 2, LANES), jnp.float32)
    full = full.at[..., off:off + w2n * cout].set(m.reshape(KH, wp, cin, 2, w2n * cout))
    full = full.reshape(KH, wp * cin, 2 * LANES)
    if k_pad is not None and k_pad > wp * cin:
        full = jnp.pad(full, ((0, 0), (0, k_pad - wp * cin), (0, 0)))
    return full.astype(jnp.bfloat16)


def _prep_shifted_input(x_nhwc, rows_pad, k_pad):
    """(N,H,W,C) -> (3, 2*rows_pad, k_pad) bf16 shifted/phase row slabs."""
    N, H, W, C = x_nhwc.shape
    H2 = H // 2
    k1 = (W + 2) * C
    xp = jnp.pad(x_nhwc, ((0, 0), (1, 1), (1, 1), (0, 0)))
    xf = xp.reshape(N, H + 2, k1)
    taps = []
    for kh in range(3):
        phases = []
        for ph in range(2):
            s = xf[:, ph + kh: ph + kh + 2 * H2: 2, :]           # (N, H2, k1)
            s = jnp.pad(s, ((0, 0), (1, 1), (0, 0)))             # h2 padding rows
            s = jnp.transpose(s, (1, 0, 2)).reshape((H2 + 2) * N, k1)
            s = jnp.pad(s, ((0, rows_pad - (H2 + 2) * N), (0, k_pad - k1)))
            phases.append(s)
        taps.append(jnp.concatenate(phases, axis=0))
    return jnp.stack(taps, axis=0).astype(jnp.bfloat16)


def prepare_kernel_params(params, *, h, w):
    """One-time prep of kernel-ready weights (hoisted out of the forward path)."""
    cin, c1 = params["conv1_w"].shape[2], params["conv1_w"].shape[3]
    c2 = params["conv2_w"].shape[3]
    feat = params["fc1_w"].shape[1]
    nc = params["cls_w"].shape[1]
    w2, w4, h4 = w // 2, w // 4, h // 4
    assert h % 4 == 0 and w % 4 == 0
    assert feat == LANES, "fused kernel assumes feature_len == 128"
    assert (w2 + 2) * c1 <= LANES and w4 * c2 <= LANES
    assert params["fc1_w"].shape[0] == h4 * w4 * c2

    k1 = _round_up((w + 2) * cin, LANES)
    bw1 = _banded_conv_weight(params["conv1_w"], in_w=w, out_pad=True, k_pad=k1)
    bw2 = _banded_conv_weight(params["conv2_w"], in_w=w2, out_pad=False, k_pad=LANES)

    b1 = jnp.zeros((LANES,), jnp.float32).at[c1:c1 + w2 * c1].set(
        jnp.tile(params["conv1_b"], w2)).reshape(1, LANES)
    b2 = jnp.zeros((LANES,), jnp.float32).at[:w4 * c2].set(
        jnp.tile(params["conv2_b"], w4)).reshape(1, LANES)

    fc1w = params["fc1_w"].reshape(h4, w4 * c2, feat)            # flatten order (h4, w4, c2)
    fc1w = jnp.pad(fc1w, ((0, 0), (0, LANES - w4 * c2), (0, 0))).astype(jnp.bfloat16)
    clsw = jnp.pad(params["cls_w"], ((0, 0), (0, LANES - nc))).astype(jnp.bfloat16)
    clsb = jnp.pad(params["cls_b"], (0, LANES - nc)).reshape(1, LANES).astype(jnp.float32)

    return {
        "bw1": bw1, "b1": b1, "bw2": bw2, "b2": b2,
        "fc1w": fc1w, "fc1b": params["fc1_b"].reshape(1, feat).astype(jnp.float32),
        "fc2w": params["fc2_w"].astype(jnp.bfloat16),
        "fc2b": params["fc2_b"].reshape(1, feat).astype(jnp.float32),
        "clsw": clsw, "clsb": clsb,
        "k1": jnp.int32(k1),  # kept only for sanity; shapes carry the real info
    }


@functools.partial(jax.jit, static_argnames=("num_classes",))
def mvcnn_forward(kparams, x, *, num_classes):
    """x: (B, V, C, H, W) -> (logits (B,NC), last_fc (B,F), x_view (B,V,F))."""
    B, V, C, H, W = x.shape
    N = B * V
    xn = jnp.transpose(x.reshape(N, C, H, W), (0, 2, 3, 1))      # NCHW -> NHWC
    rows = (H // 2 + 2) * N
    rows_pad = _round_up(rows, 8)
    k1 = kparams["bw1"].shape[1]
    xsh = _prep_shifted_input(xn, rows_pad, k1)                  # (3, 2*rows_pad, k1) bf16

    kern = functools.partial(_mvcnn_kernel, n_img=N, batch=B, views=V,
                             h2_blocks=H // 2, h4_blocks=H // 4, rows_pad=rows_pad)
    feat = kparams["fc2w"].shape[1]
    xview, last, logits_p = pl.pallas_call(
        kern,
        out_shape=(jax.ShapeDtypeStruct((N, feat), jnp.float32),
                   jax.ShapeDtypeStruct((B, feat), jnp.float32),
                   jax.ShapeDtypeStruct((B, LANES), jnp.float32)),
        scratch_shapes=[pltpu.VMEM((rows_pad, LANES), jnp.bfloat16)],
    )(xsh, kparams["bw1"], kparams["b1"], kparams["bw2"], kparams["b2"],
      kparams["fc1w"], kparams["fc1b"], kparams["fc2w"], kparams["fc2b"],
      kparams["clsw"], kparams["clsb"])
    return logits_p[:, :num_classes], last, xview.reshape(B, V, feat)


# ----------------------------------------------------------------------------
# Parameters (small stand-in for the VGG13 backbone + fc head + classifier)
# ----------------------------------------------------------------------------
def init_params(key, *, cin=3, h=16, num_classes=40, feat=128, c1=8, c2=16):
    ks = jax.random.split(key, 10)
    s = 0.1
    flat = (h // 4) * (h // 4) * c2
    return {
        "conv1_w": jax.random.normal(ks[0], (3, 3, cin, c1), jnp.float32) * s,   # HWIO
        "conv1_b": jax.random.normal(ks[1], (c1,), jnp.float32) * s,
        "conv2_w": jax.random.normal(ks[2], (3, 3, c1, c2), jnp.float32) * s,
        "conv2_b": jax.random.normal(ks[3], (c2,), jnp.float32) * s,
        "fc1_w": jax.random.normal(ks[4], (flat, feat), jnp.float32) * s,
        "fc1_b": jax.random.normal(ks[5], (feat,), jnp.float32) * s,
        "fc2_w": jax.random.normal(ks[6], (feat, feat), jnp.float32) * s,
        "fc2_b": jax.random.normal(ks[7], (feat,), jnp.float32) * s,
        "cls_w": jax.random.normal(ks[8], (feat, num_classes), jnp.float32) * s,
        "cls_b": jax.random.normal(ks[9], (num_classes,), jnp.float32) * s,
    }


# ----------------------------------------------------------------------------
# Pure-JAX reference (same bf16 MXU casts) for validation
# ----------------------------------------------------------------------------
def _conv_pool_reference(x_nhwc, w_hwio, b):
    N, H, W, C = x_nhwc.shape
    Co = w_hwio.shape[-1]
    xp = jnp.pad(x_nhwc, ((0, 0), (1, 1), (1, 1), (0, 0)))
    cols = [xp[:, kh:kh + H, kw:kw + W, :] for kh in range(3) for kw in range(3)]
    pt = jnp.concatenate(cols, axis=-1).reshape(N * H * W, 9 * C)
    y = jnp.dot(pt.astype(jnp.bfloat16), w_hwio.reshape(9 * C, Co).astype(jnp.bfloat16),
                preferred_element_type=jnp.float32) + b
    y = jnp.maximum(y, 0.0).reshape(N, H, W, Co)
    return jnp.max(y.reshape(N, H // 2, 2, W // 2, 2, Co), axis=(2, 4))


def mvcnn_reference(params, x):
    B, V, C, H, W = x.shape
    N = B * V
    xn = jnp.transpose(x.reshape(N, C, H, W), (0, 2, 3, 1))
    xn = _conv_pool_reference(xn, params["conv1_w"], params["conv1_b"])
    xn = _conv_pool_reference(xn, params["conv2_w"], params["conv2_b"])
    xf = xn.reshape(N, -1)                                        # flatten (h, w, c)
    h1 = jnp.maximum(jnp.dot(xf.astype(jnp.bfloat16), params["fc1_w"].astype(jnp.bfloat16),
                             preferred_element_type=jnp.float32) + params["fc1_b"], 0.0)
    h2 = jnp.maximum(jnp.dot(h1.astype(jnp.bfloat16), params["fc2_w"].astype(jnp.bfloat16),
                             preferred_element_type=jnp.float32) + params["fc2_b"], 0.0)
    x_view = h2.reshape(B, V, -1)
    last = jnp.max(x_view, axis=1)
    logits = jnp.dot(last.astype(jnp.bfloat16), params["cls_w"].astype(jnp.bfloat16),
                     preferred_element_type=jnp.float32) + params["cls_b"]
    return logits, last, x_view


if __name__ == "__main__":
    key = jax.random.PRNGKey(0)
    kp_key, kx = jax.random.split(key)

    B, V, C, H, W = 2, 3, 3, 16, 16
    num_classes, feat = 40, 128

    params = init_params(kp_key, cin=C, h=H, num_classes=num_classes, feat=feat)
    x = jax.random.normal(kx, (B, V, C, H, W), jnp.float32)

    kparams = prepare_kernel_params(params, h=H, w=W)             # one-time weight prep
    logits, last_fc, x_view = mvcnn_forward(kparams, x, num_classes=num_classes)
    jax.block_until_ready((logits, last_fc, x_view))

    assert logits.shape == (B, num_classes)
    assert last_fc.shape == (B, feat)
    assert x_view.shape == (B, V, feat)
    # last_fc must equal the view-wise max of x_view (same f32 values)
    assert bool(jnp.allclose(last_fc, jnp.max(x_view, axis=1), atol=1e-6))

    # cross-check against a pure-JAX reference using the same bf16 MXU casts
    r_logits, r_last, r_xview = mvcnn_reference(params, x)
    assert bool(jnp.allclose(x_view, r_xview, rtol=5e-2, atol=5e-2))
    assert bool(jnp.allclose(last_fc, r_last, rtol=5e-2, atol=5e-2))
    assert bool(jnp.allclose(logits, r_logits, rtol=5e-2, atol=5e-2))

    print("KERNEL_OK")
</pallas_src>

<mosaic_0001>
module attributes {stable_mosaic.version = 11 : i64} {
  func.func @_mvcnn_kernel(%arg0: memref<3x128x128xbf16, #tpu.memory_space<vmem>>, %arg1: memref<3x128x256xbf16, #tpu.memory_space<vmem>>, %arg2: memref<1x128xf32, #tpu.memory_space<vmem>>, %arg3: memref<3x128x256xbf16, #tpu.memory_space<vmem>>, %arg4: memref<1x128xf32, #tpu.memory_space<vmem>>, %arg5: memref<4x128x128xbf16, #tpu.memory_space<vmem>>, %arg6: memref<1x128xf32, #tpu.memory_space<vmem>>, %arg7: memref<128x128xbf16, #tpu.memory_space<vmem>>, %arg8: memref<1x128xf32, #tpu.memory_space<vmem>>, %arg9: memref<128x128xbf16, #tpu.memory_space<vmem>>, %arg10: memref<1x128xf32, #tpu.memory_space<vmem>>, %arg11: memref<6x128xf32, #tpu.memory_space<vmem>>, %arg12: memref<2x128xf32, #tpu.memory_space<vmem>>, %arg13: memref<2x128xf32, #tpu.memory_space<vmem>>, %arg14: memref<64x128xbf16, #tpu.memory_space<vmem>>) attributes {dimension_semantics = [], scalar_prefetch = 0 : i64, scratch_operands = 1 : i64, tpu.core_type = #tpu.core_type<tc>} {
    %cst = arith.constant 0.000000e+00 : f32
    %0 = vector.broadcast %cst : f32 to vector<128x256xf32>
    %c0 = arith.constant 0 : index
    %c0_0 = arith.constant 0 : index
    %c0_1 = arith.constant 0 : index
    %1 = vector.load %arg0[%c0, %c0_0, %c0_1] : memref<3x128x128xbf16, #tpu.memory_space<vmem>>, vector<1x128x128xbf16>
    %2 = vector.shape_cast %1 : vector<1x128x128xbf16> to vector<128x128xbf16>
    %c0_2 = arith.constant 0 : index
    %c0_3 = arith.constant 0 : index
    %c0_4 = arith.constant 0 : index
    %3 = vector.load %arg1[%c0_2, %c0_3, %c0_4] : memref<3x128x256xbf16, #tpu.memory_space<vmem>>, vector<1x128x256xbf16>
    %4 = vector.shape_cast %3 : vector<1x128x256xbf16> to vector<128x256xbf16>
    %cst_5 = arith.constant dense<0.000000e+00> : vector<128x256xf32>
    %5 = tpu.matmul %2, %4, %cst_5 {dimension_numbers = #tpu.dot_dimension_numbers<[1], [0], [0], [1], [0, 0, 1, 1], [], []>} : vector<128x128xbf16>, vector<128x256xbf16>, vector<128x256xf32> -> vector<128x256xf32>
    %6 = arith.addf %0, %5 : vector<128x256xf32>
    %c1 = arith.constant 1 : index
    %c0_6 = arith.constant 0 : index
    %c0_7 = arith.constant 0 : index
    %7 = vector.load %arg0[%c1, %c0_6, %c0_7] : memref<3x128x128xbf16, #tpu.memory_space<vmem>>, vector<1x128x128xbf16>
    %8 = vector.shape_cast %7 : vector<1x128x128xbf16> to vector<128x128xbf16>
    %c1_8 = arith.constant 1 : index
    %c0_9 = arith.constant 0 : index
    %c0_10 = arith.constant 0 : index
    %9 = vector.load %arg1[%c1_8, %c0_9, %c0_10] : memref<3x128x256xbf16, #tpu.memory_space<vmem>>, vector<1x128x256xbf16>
    %10 = vector.shape_cast %9 : vector<1x128x256xbf16> to vector<128x256xbf16>
    %cst_11 = arith.constant dense<0.000000e+00> : vector<128x256xf32>
    %11 = tpu.matmul %8, %10, %cst_11 {dimension_numbers = #tpu.dot_dimension_numbers<[1], [0], [0], [1], [0, 0, 1, 1], [], []>} : vector<128x128xbf16>, vector<128x256xbf16>, vector<128x256xf32> -> vector<128x256xf32>
    %12 = arith.addf %6, %11 : vector<128x256xf32>
    %c2 = arith.constant 2 : index
    %c0_12 = arith.constant 0 : index
    %c0_13 = arith.constant 0 : index
    %13 = vector.load %arg0[%c2, %c0_12, %c0_13] : memref<3x128x128xbf16, #tpu.memory_space<vmem>>, vector<1x128x128xbf16>
    %14 = vector.shape_cast %13 : vector<1x128x128xbf16> to vector<128x128xbf16>
    %c2_14 = arith.constant 2 : index
    %c0_15 = arith.constant 0 : index
    %c0_16 = arith.constant 0 : index
    %15 = vector.load %arg1[%c2_14, %c0_15, %c0_16] : memref<3x128x256xbf16, #tpu.memory_space<vmem>>, vector<1x128x256xbf16>
    %16 = vector.shape_cast %15 : vector<1x128x256xbf16> to vector<128x256xbf16>
    %cst_17 = arith.constant dense<0.000000e+00> : vector<128x256xf32>
    %17 = tpu.matmul %14, %16, %cst_17 {dimension_numbers = #tpu.dot_dimension_numbers<[1], [0], [0], [1], [0, 0, 1, 1], [], []>} : vector<128x128xbf16>, vector<128x256xbf16>, vector<128x256xf32> -> vector<128x256xf32>
    %18 = arith.addf %12, %17 : vector<128x256xf32>
    %19 = vector.extract_strided_slice %18 {offsets = [0, 0], sizes = [64, 256], strides = [1, 1]} : vector<128x256xf32> to vector<64x256xf32>
    %20 = vector.extract_strided_slice %18 {offsets = [64, 0], sizes = [64, 256], strides = [1, 1]} : vector<128x256xf32> to vector<64x256xf32>
    %21 = arith.maximumf %19, %20 : vector<64x256xf32>
    %22 = vector.extract_strided_slice %21 {offsets = [0, 0], sizes = [64, 128], strides = [1, 1]} : vector<64x256xf32> to vector<64x128xf32>
    %23 = vector.extract_strided_slice %21 {offsets = [0, 128], sizes = [64, 128], strides = [1, 1]} : vector<64x256xf32> to vector<64x128xf32>
    %24 = arith.maximumf %22, %23 : vector<64x128xf32>
    %25 = tpu.iota {dimensions = array<i32: 0>} : vector<64x1xi32>
    %c6_i32 = arith.constant 6 : i32
    %26 = vector.broadcast %c6_i32 : i32 to vector<64x1xi32>
    %27 = arith.cmpi sge, %25, %26 : vector<64x1xi32>
    %c54_i32 = arith.constant 54 : i32
    %28 = vector.broadcast %c54_i32 : i32 to vector<64x1xi32>
    %29 = arith.cmpi slt, %25, %28 : vector<64x1xi32>
    %30 = arith.andi %27, %29 : vector<64x1xi1>
    %31 = arith.extui %30 : vector<64x1xi1> to vector<64x1xi32>
    %32 = arith.sitofp %31 : vector<64x1xi32> to vector<64x1xf32>
    %c0_18 = arith.constant 0 : index
    %c0_19 = arith.constant 0 : index
    %33 = vector.load %arg2[%c0_18, %c0_19] : memref<1x128xf32, #tpu.memory_space<vmem>>, vector<1x128xf32>
    %34 = vector.broadcast %32 : vector<64x1xf32> to vector<64x128xf32>
    %35 = vector.broadcast %33 : vector<1x128xf32> to vector<64x128xf32>
    %36 = arith.mulf %34, %35 : vector<64x128xf32>
    %37 = arith.addf %24, %36 : vector<64x128xf32>
    %cst_20 = arith.constant 0.000000e+00 : f32
    %38 = vector.broadcast %cst_20 : f32 to vector<64x128xf32>
    %39 = arith.maximumf %37, %38 : vector<64x128xf32>
    %40 = arith.truncf %39 : vector<64x128xf32> to vector<64x128xbf16>
    %c0_21 = arith.constant 0 : index
    %c0_22 = arith.constant 0 : index
    %41 = vector.load %arg14[%c0_21, %c0_22] : memref<64x128xbf16, #tpu.memory_space<vmem>>, vector<64x128xbf16>
    tpu.vector_store %arg14[%c0_21, %c0_22], %40 {strides = array<i32>} : memref<64x128xbf16, #tpu.memory_space<vmem>>, vector<64x128xbf16>,
    %cst_23 = arith.constant 0.000000e+00 : f32
    %42 = vector.broadcast %cst_23 : f32 to vector<6x128xf32>
    %cst_24 = arith.constant 0.000000e+00 : f32
    %43 = vector.broadcast %cst_24 : f32 to vector<12x256xf32>
    %c0_25 = arith.constant 0 : index
    %c0_26 = arith.constant 0 : index
    %44 = vector.load %arg14[%c0_25, %c0_26] : memref<64x128xbf16, #tpu.memory_space<vmem>>, vector<12x128xbf16>
    %c0_27 = arith.constant 0 : index
    %c0_28 = arith.constant 0 : index
    %c0_29 = arith.constant 0 : index
    %45 = vector.load %arg3[%c0_27, %c0_28, %c0_29] : memref<3x128x256xbf16, #tpu.memory_space<vmem>>, vector<1x128x256xbf16>
    %46 = vector.shape_cast %45 : vector<1x128x256xbf16> to vector<128x256xbf16>
    %cst_30 = arith.constant dense<0.000000e+00> : vector<12x256xf32>
    %47 = tpu.matmul %44, %46, %cst_30 {dimension_numbers = #tpu.dot_dimension_numbers<[1], [0], [0], [1], [0, 0, 1, 1], [], []>} : vector<12x128xbf16>, vector<128x256xbf16>, vector<12x256xf32> -> vector<12x256xf32>
    %48 = arith.addf %43, %47 : vector<12x256xf32>
    %c6 = arith.constant 6 : index
    %c0_31 = arith.constant 0 : index
    %49 = vector.load %arg14[%c6, %c0_31] : memref<64x128xbf16, #tpu.memory_space<vmem>>, vector<12x128xbf16>
    %c1_32 = arith.constant 1 : index
    %c0_33 = arith.constant 0 : index
    %c0_34 = arith.constant 0 : index
    %50 = vector.load %arg3[%c1_32, %c0_33, %c0_34] : memref<3x128x256xbf16, #tpu.memory_space<vmem>>, vector<1x128x256xbf16>
    %51 = vector.shape_cast %50 : vector<1x128x256xbf16> to vector<128x256xbf16>
    %cst_35 = arith.constant dense<0.000000e+00> : vector<12x256xf32>
    %52 = tpu.matmul %49, %51, %cst_35 {dimension_numbers = #tpu.dot_dimension_numbers<[1], [0], [0], [1], [0, 0, 1, 1], [], []>} : vector<12x128xbf16>, vector<128x256xbf16>, vector<12x256xf32> -> vector<12x256xf32>
    %53 = arith.addf %48, %52 : vector<12x256xf32>
    %c12 = arith.constant 12 : index
    %c0_36 = arith.constant 0 : index
    %54 = vector.load %arg14[%c12, %c0_36] : memref<64x128xbf16, #tpu.memory_space<vmem>>, vector<12x128xbf16>
    %c2_37 = arith.constant 2 : index
    %c0_38 = arith.constant 0 : index
    %c0_39 = arith.constant 0 : index
    %55 = vector.load %arg3[%c2_37, %c0_38, %c0_39] : memref<3x128x256xbf16, #tpu.memory_space<vmem>>, vector<1x128x256xbf16>
    %56 = vector.shape_cast %55 : vector<1x128x256xbf16> to vector<128x256xbf16>
    %cst_40 = arith.constant dense<0.000000e+00> : vector<12x256xf32>
    %57 = tpu.matmul %54, %56, %cst_40 {dimension_numbers = #tpu.dot_dimension_numbers<[1], [0], [0], [1], [0, 0, 1, 1], [], []>} : vector<12x128xbf16>, vector<128x256xbf16>, vector<12x256xf32> -> vector<12x256xf32>
    %58 = arith.addf %53, %57 : vector<12x256xf32>
    %59 = vector.extract_strided_slice %58 {offsets = [0, 0], sizes = [6, 256], strides = [1, 1]} : vector<12x256xf32> to vector<6x256xf32>
    %60 = vector.extract_strided_slice %58 {offsets = [6, 0], sizes = [6, 256], strides = [1, 1]} : vector<12x256xf32> to vector<6x256xf32>
    %61 = arith.maximumf %59, %60 : vector<6x256xf32>
    %62 = vector.extract_strided_slice %61 {offsets = [0, 0], sizes = [6, 128], strides = [1, 1]} : vector<6x256xf32> to vector<6x128xf32>
    %63 = vector.extract_strided_slice %61 {offsets = [0, 128], sizes = [6, 128], strides = [1, 1]} : vector<6x256xf32> to vector<6x128xf32>
    %64 = arith.maximumf %62, %63 : vector<6x128xf32>
    %c0_41 = arith.constant 0 : index
    %c0_42 = arith.constant 0 : index
    %65 = vector.load %arg4[%c0_41, %c0_42] : memref<1x128xf32, #tpu.memory_space<vmem>>, vector<1x128xf32>
    %66 = vector.broadcast %65 : vector<1x128xf32> to vector<6x128xf32>
    %67 = arith.addf %64, %66 : vector<6x128xf32>
    %cst_43 = arith.constant 0.000000e+00 : f32
    %68 = vector.broadcast %cst_43 : f32 to vector<6x128xf32>
    %69 = arith.maximumf %67, %68 : vector<6x128xf32>
    %70 = arith.truncf %69 : vector<6x128xf32> to vector<6x128xbf16>
    %c0_44 = arith.constant 0 : index
    %c0_45 = arith.constant 0 : index
    %c0_46 = arith.constant 0 : index
    %71 = vector.load %arg5[%c0_44, %c0_45, %c0_46] : memref<4x128x128xbf16, #tpu.memory_space<vmem>>, vector<1x128x128xbf16>
    %72 = vector.shape_cast %71 : vector<1x128x128xbf16> to vector<128x128xbf16>
    %cst_47 = arith.constant dense<0.000000e+00> : vector<6x128xf32>
    %73 = tpu.matmul %70, %72, %cst_47 {dimension_numbers = #tpu.dot_dimension_numbers<[1], [0], [0], [1], [0, 0, 1, 1], [], []>} : vector<6x128xbf16>, vector<128x128xbf16>, vector<6x128xf32> -> vector<6x128xf32>
    %74 = arith.addf %42, %73 : vector<6x128xf32>
    %cst_48 = arith.constant 0.000000e+00 : f32
    %75 = vector.broadcast %cst_48 : f32 to vector<12x256xf32>
    %c12_49 = arith.constant 12 : index
    %c0_50 = arith.constant 0 : index
    %76 = vector.load %arg14[%c12_49, %c0_50] : memref<64x128xbf16, #tpu.memory_space<vmem>>, vector<12x128xbf16>
    %c0_51 = arith.constant 0 : index
    %c0_52 = arith.constant 0 : index
    %c0_53 = arith.constant 0 : index
    %77 = vector.load %arg3[%c0_51, %c0_52, %c0_53] : memref<3x128x256xbf16, #tpu.memory_space<vmem>>, vector<1x128x256xbf16>
    %78 = vector.shape_cast %77 : vector<1x128x256xbf16> to vector<128x256xbf16>
    %cst_54 = arith.constant dense<0.000000e+00> : vector<12x256xf32>
    %79 = tpu.matmul %76, %78, %cst_54 {dimension_numbers = #tpu.dot_dimension_numbers<[1], [0], [0], [1], [0, 0, 1, 1], [], []>} : vector<12x128xbf16>, vector<128x256xbf16>, vector<12x256xf32> -> vector<12x256xf32>
    %80 = arith.addf %75, %79 : vector<12x256xf32>
    %c18 = arith.constant 18 : index
    %c0_55 = arith.constant 0 : index
    %81 = vector.load %arg14[%c18, %c0_55] : memref<64x128xbf16, #tpu.memory_space<vmem>>, vector<12x128xbf16>
    %c1_56 = arith.constant 1 : index
    %c0_57 = arith.constant 0 : index
    %c0_58 = arith.constant 0 : index
    %82 = vector.load %arg3[%c1_56, %c0_57, %c0_58] : memref<3x128x256xbf16, #tpu.memory_space<vmem>>, vector<1x128x256xbf16>
    %83 = vector.shape_cast %82 : vector<1x128x256xbf16> to vector<128x256xbf16>
    %cst_59 = arith.constant dense<0.000000e+00> : vector<12x256xf32>
    %84 = tpu.matmul %81, %83, %cst_59 {dimension_numbers = #tpu.dot_dimension_numbers<[1], [0], [0], [1], [0, 0, 1, 1], [], []>} : vector<12x128xbf16>, vector<128x256xbf16>, vector<12x256xf32> -> vector<12x256xf32>
    %85 = arith.addf %80, %84 : vector<12x256xf32>
    %c24 = arith.constant 24 : index
    %c0_60 = arith.constant 0 : index
    %86 = vector.load %arg14[%c24, %c0_60] : memref<64x128xbf16, #tpu.memory_space<vmem>>, vector<12x128xbf16>
    %c2_61 = arith.constant 2 : index
    %c0_62 = arith.constant 0 : index
    %c0_63 = arith.constant 0 : index
    %87 = vector.load %arg3[%c2_61, %c0_62, %c0_63] : memref<3x128x256xbf16, #tpu.memory_space<vmem>>, vector<1x128x256xbf16>
    %88 = vector.shape_cast %87 : vector<1x128x256xbf16> to vector<128x256xbf16>
    %cst_64 = arith.constant dense<0.000000e+00> : vector<12x256xf32>
    %89 = tpu.matmul %86, %88, %cst_64 {dimension_numbers = #tpu.dot_dimension_numbers<[1], [0], [0], [1], [0, 0, 1, 1], [], []>} : vector<12x128xbf16>, vector<128x256xbf16>, vector<12x256xf32> -> vector<12x256xf32>
    %90 = arith.addf %85, %89 : vector<12x256xf32>
    %91 = vector.extract_strided_slice %90 {offsets = [0, 0], sizes = [6, 256], strides = [1, 1]} : vector<12x256xf32> to vector<6x256xf32>
    %92 = vector.extract_strided_slice %90 {offsets = [6, 0], sizes = [6, 256], strides = [1, 1]} : vector<12x256xf32> to vector<6x256xf32>
    %93 = arith.maximumf %91, %92 : vector<6x256xf32>
    %94 = vector.extract_strided_slice %93 {offsets = [0, 0], sizes = [6, 128], strides = [1, 1]} : vector<6x256xf32> to vector<6x128xf32>
    %95 = vector.extract_strided_slice %93 {offsets = [0, 128], sizes = [6, 128], strides = [1, 1]} : vector<6x256xf32> to vector<6x128xf32>
    %96 = arith.maximumf %94, %95 : vector<6x128xf32>
    %c0_65 = arith.constant 0 : index
    %c0_66 = arith.constant 0 : index
    %97 = vector.load %arg4[%c0_65, %c0_66] : memref<1x128xf32, #tpu.memory_space<vmem>>, vector<1x128xf32>
    %98 = vector.broadcast %97 : vector<1x128xf32> to vector<6x128xf32>
    %99 = arith.addf %96, %98 : vector<6x128xf32>
    %cst_67 = arith.constant 0.000000e+00 : f32
    %100 = vector.broadcast %cst_67 : f32 to vector<6x128xf32>
    %101 = arith.maximumf %99, %100 : vector<6x128xf32>
    %102 = arith.truncf %101 : vector<6x128xf32> to vector<6x128xbf16>
    %c1_68 = arith.constant 1 : index
    %c0_69 = arith.constant 0 : index
    %c0_70 = arith.constant 0 : index
    %103 = vector.load %arg5[%c1_68, %c0_69, %c0_70] : memref<4x128x128xbf16, #tpu.memory_space<vmem>>, vector<1x128x128xbf16>
    %104 = vector.shape_cast %103 : vector<1x128x128xbf16> to vector<128x128xbf16>
    %cst_71 = arith.constant dense<0.000000e+00> : vector<6x128xf32>
    %105 = tpu.matmul %102, %104, %cst_71 {dimension_numbers = #tpu.dot_dimension_numbers<[1], [0], [0], [1], [0, 0, 1, 1], [], []>} : vector<6x128xbf16>, vector<128x128xbf16>, vector<6x128xf32> -> vector<6x128xf32>
    %106 = arith.addf %74, %105 : vector<6x128xf32>
    %cst_72 = arith.constant 0.000000e+00 : f32
    %107 = vector.broadcast %cst_72 : f32 to vector<12x256xf32>
    %c24_73 = arith.constant 24 : index
    %c0_74 = arith.constant 0 : index
    %108 = vector.load %arg14[%c24_73, %c0_74] : memref<64x128xbf16, #tpu.memory_space<vmem>>, vector<12x128xbf16>
    %c0_75 = arith.constant 0 : index
    %c0_76 = arith.constant 0 : index
    %c0_77 = arith.constant 0 : index
    %109 = vector.load %arg3[%c0_75, %c0_76, %c0_77] : memref<3x128x256xbf16, #tpu.memory_space<vmem>>, vector<1x128x256xbf16>
    %110 = vector.shape_cast %109 : vector<1x128x256xbf16> to vector<128x256xbf16>
    %cst_78 = arith.constant dense<0.000000e+00> : vector<12x256xf32>
    %111 = tpu.matmul %108, %110, %cst_78 {dimension_numbers = #tpu.dot_dimension_numbers<[1], [0], [0], [1], [0, 0, 1, 1], [], []>} : vector<12x128xbf16>, vector<128x256xbf16>, vector<12x256xf32> -> vector<12x256xf32>
    %112 = arith.addf %107, %111 : vector<12x256xf32>
    %c30 = arith.constant 30 : index
    %c0_79 = arith.constant 0 : index
    %113 = vector.load %arg14[%c30, %c0_79] : memref<64x128xbf16, #tpu.memory_space<vmem>>, vector<12x128xbf16>
    %c1_80 = arith.constant 1 : index
    %c0_81 = arith.constant 0 : index
    %c0_82 = arith.constant 0 : index
    %114 = vector.load %arg3[%c1_80, %c0_81, %c0_82] : memref<3x128x256xbf16, #tpu.memory_space<vmem>>, vector<1x128x256xbf16>
    %115 = vector.shape_cast %114 : vector<1x128x256xbf16> to vector<128x256xbf16>
    %cst_83 = arith.constant dense<0.000000e+00> : vector<12x256xf32>
    %116 = tpu.matmul %113, %115, %cst_83 {dimension_numbers = #tpu.dot_dimension_numbers<[1], [0], [0], [1], [0, 0, 1, 1], [], []>} : vector<12x128xbf16>, vector<128x256xbf16>, vector<12x256xf32> -> vector<12x256xf32>
    %117 = arith.addf %112, %116 : vector<12x256xf32>
    %c36 = arith.constant 36 : index
    %c0_84 = arith.constant 0 : index
    %118 = vector.load %arg14[%c36, %c0_84] : memref<64x128xbf16, #tpu.memory_space<vmem>>, vector<12x128xbf16>
    %c2_85 = arith.constant 2 : index
    %c0_86 = arith.constant 0 : index
    %c0_87 = arith.constant 0 : index
    %119 = vector.load %arg3[%c2_85, %c0_86, %c0_87] : memref<3x128x256xbf16, #tpu.memory_space<vmem>>, vector<1x128x256xbf16>
    %120 = vector.shape_cast %119 : vector<1x128x256xbf16> to vector<128x256xbf16>
    %cst_88 = arith.constant dense<0.000000e+00> : vector<12x256xf32>
    %121 = tpu.matmul %118, %120, %cst_88 {dimension_numbers = #tpu.dot_dimension_numbers<[1], [0], [0], [1], [0, 0, 1, 1], [], []>} : vector<12x128xbf16>, vector<128x256xbf16>, vector<12x256xf32> -> vector<12x256xf32>
    %122 = arith.addf %117, %121 : vector<12x256xf32>
    %123 = vector.extract_strided_slice %122 {offsets = [0, 0], sizes = [6, 256], strides = [1, 1]} : vector<12x256xf32> to vector<6x256xf32>
    %124 = vector.extract_strided_slice %122 {offsets = [6, 0], sizes = [6, 256], strides = [1, 1]} : vector<12x256xf32> to vector<6x256xf32>
    %125 = arith.maximumf %123, %124 : vector<6x256xf32>
    %126 = vector.extract_strided_slice %125 {offsets = [0, 0], sizes = [6, 128], strides = [1, 1]} : vector<6x256xf32> to vector<6x128xf32>
    %127 = vector.extract_strided_slice %125 {offsets = [0, 128], sizes = [6, 128], strides = [1, 1]} : vector<6x256xf32> to vector<6x128xf32>
    %128 = arith.maximumf %126, %127 : vector<6x128xf32>
    %c0_89 = arith.constant 0 : index
    %c0_90 = arith.constant 0 : index
    %129 = vector.load %arg4[%c0_89, %c0_90] : memref<1x128xf32, #tpu.memory_space<vmem>>, vector<1x128xf32>
    %130 = vector.broadcast %129 : vector<1x128xf32> to vector<6x128xf32>
    %131 = arith.addf %128, %130 : vector<6x128xf32>
    %cst_91 = arith.constant 0.000000e+00 : f32
    %132 = vector.broadcast %cst_91 : f32 to vector<6x128xf32>
    %133 = arith.maximumf %131, %132 : vector<6x128xf32>
    %134 = arith.truncf %133 : vector<6x128xf32> to vector<6x128xbf16>
    %c2_92 = arith.constant 2 : index
    %c0_93 = arith.constant 0 : index
    %c0_94 = arith.constant 0 : index
    %135 = vector.load %arg5[%c2_92, %c0_93, %c0_94] : memref<4x128x128xbf16, #tpu.memory_space<vmem>>, vector<1x128x128xbf16>
    %136 = vector.shape_cast %135 : vector<1x128x128xbf16> to vector<128x128xbf16>
    %cst_95 = arith.constant dense<0.000000e+00> : vector<6x128xf32>
    %137 = tpu.matmul %134, %136, %cst_95 {dimension_numbers = #tpu.dot_dimension_numbers<[1], [0], [0], [1], [0, 0, 1, 1], [], []>} : vector<6x128xbf16>, vector<128x128xbf16>, vector<6x128xf32> -> vector<6x128xf32>
    %138 = arith.addf %106, %137 : vector<6x128xf32>
    %cst_96 = arith.constant 0.000000e+00 : f32
    %139 = vector.broadcast %cst_96 : f32 to vector<12x256xf32>
    %c36_97 = arith.constant 36 : index
    %c0_98 = arith.constant 0 : index
    %140 = vector.load %arg14[%c36_97, %c0_98] : memref<64x128xbf16, #tpu.memory_space<vmem>>, vector<12x128xbf16>
    %c0_99 = arith.constant 0 : index
    %c0_100 = arith.constant 0 : index
    %c0_101 = arith.constant 0 : index
    %141 = vector.load %arg3[%c0_99, %c0_100, %c0_101] : memref<3x128x256xbf16, #tpu.memory_space<vmem>>, vector<1x128x256xbf16>
    %142 = vector.shape_cast %141 : vector<1x128x256xbf16> to vector<128x256xbf16>
    %cst_102 = arith.constant dense<0.000000e+00> : vector<12x256xf32>
    %143 = tpu.matmul %140, %142, %cst_102 {dimension_numbers = #tpu.dot_dimension_numbers<[1], [0], [0], [1], [0, 0, 1, 1], [], []>} : vector<12x128xbf16>, vector<128x256xbf16>, vector<12x256xf32> -> vector<12x256xf32>
    %144 = arith.addf %139, %143 : vector<12x256xf32>
    %c42 = arith.constant 42 : index
    %c0_103 = arith.constant 0 : index
    %145 = vector.load %arg14[%c42, %c0_103] : memref<64x128xbf16, #tpu.memory_space<vmem>>, vector<12x128xbf16>
    %c1_104 = arith.constant 1 : index
    %c0_105 = arith.constant 0 : index
    %c0_106 = arith.constant 0 : index
    %146 = vector.load %arg3[%c1_104, %c0_105, %c0_106] : memref<3x128x256xbf16, #tpu.memory_space<vmem>>, vector<1x128x256xbf16>
    %147 = vector.shape_cast %146 : vector<1x128x256xbf16> to vector<128x256xbf16>
    %cst_107 = arith.constant dense<0.000000e+00> : vector<12x256xf32>
    %148 = tpu.matmul %145, %147, %cst_107 {dimension_numbers = #tpu.dot_dimension_numbers<[1], [0], [0], [1], [0, 0, 1, 1], [], []>} : vector<12x128xbf16>, vector<128x256xbf16>, vector<12x256xf32> -> vector<12x256xf32>
    %149 = arith.addf %144, %148 : vector<12x256xf32>
    %c48 = arith.constant 48 : index
    %c0_108 = arith.constant 0 : index
    %150 = vector.load %arg14[%c48, %c0_108] : memref<64x128xbf16, #tpu.memory_space<vmem>>, vector<12x128xbf16>
    %c2_109 = arith.constant 2 : index
    %c0_110 = arith.constant 0 : index
    %c0_111 = arith.constant 0 : index
    %151 = vector.load %arg3[%c2_109, %c0_110, %c0_111] : memref<3x128x256xbf16, #tpu.memory_space<vmem>>, vector<1x128x256xbf16>
    %152 = vector.shape_cast %151 : vector<1x128x256xbf16> to vector<128x256xbf16>
    %cst_112 = arith.constant dense<0.000000e+00> : vector<12x256xf32>
    %153 = tpu.matmul %150, %152, %cst_112 {dimension_numbers = #tpu.dot_dimension_numbers<[1], [0], [0], [1], [0, 0, 1, 1], [], []>} : vector<12x128xbf16>, vector<128x256xbf16>, vector<12x256xf32> -> vector<12x256xf32>
    %154 = arith.addf %149, %153 : vector<12x256xf32>
    %155 = vector.extract_strided_slice %154 {offsets = [0, 0], sizes = [6, 256], strides = [1, 1]} : vector<12x256xf32> to vector<6x256xf32>
    %156 = vector.extract_strided_slice %154 {offsets = [6, 0], sizes = [6, 256], strides = [1, 1]} : vector<12x256xf32> to vector<6x256xf32>
    %157 = arith.maximumf %155, %156 : vector<6x256xf32>
    %158 = vector.extract_strided_slice %157 {offsets = [0, 0], sizes = [6, 128], strides = [1, 1]} : vector<6x256xf32> to vector<6x128xf32>
    %159 = vector.extract_strided_slice %157 {offsets = [0, 128], sizes = [6, 128], strides = [1, 1]} : vector<6x256xf32> to vector<6x128xf32>
    %160 = arith.maximumf %158, %159 : vector<6x128xf32>
    %c0_113 = arith.constant 0 : index
    %c0_114 = arith.constant 0 : index
    %161 = vector.load %arg4[%c0_113, %c0_114] : memref<1x128xf32, #tpu.memory_space<vmem>>, vector<1x128xf32>
    %162 = vector.broadcast %161 : vector<1x128xf32> to vector<6x128xf32>
    %163 = arith.addf %160, %162 : vector<6x128xf32>
    %cst_115 = arith.constant 0.000000e+00 : f32
    %164 = vector.broadcast %cst_115 : f32 to vector<6x128xf32>
    %165 = arith.maximumf %163, %164 : vector<6x128xf32>
    %166 = arith.truncf %165 : vector<6x128xf32> to vector<6x128xbf16>
    %c3 = arith.constant 3 : index
    %c0_116 = arith.constant 0 : index
    %c0_117 = arith.constant 0 : index
    %167 = vector.load %arg5[%c3, %c0_116, %c0_117] : memref<4x128x128xbf16, #tpu.memory_space<vmem>>, vector<1x128x128xbf16>
    %168 = vector.shape_cast %167 : vector<1x128x128xbf16> to vector<128x128xbf16>
    %cst_118 = arith.constant dense<0.000000e+00> : vector<6x128xf32>
    %169 = tpu.matmul %166, %168, %cst_118 {dimension_numbers = #tpu.dot_dimension_numbers<[1], [0], [0], [1], [0, 0, 1, 1], [], []>} : vector<6x128xbf16>, vector<128x128xbf16>, vector<6x128xf32> -> vector<6x128xf32>
    %170 = arith.addf %138, %169 : vector<6x128xf32>
    %c0_119 = arith.constant 0 : index
    %c0_120 = arith.constant 0 : index
    %171 = vector.load %arg6[%c0_119, %c0_120] : memref<1x128xf32, #tpu.memory_space<vmem>>, vector<1x128xf32>
    %172 = vector.broadcast %171 : vector<1x128xf32> to vector<6x128xf32>
    %173 = arith.addf %170, %172 : vector<6x128xf32>
    %cst_121 = arith.constant 0.000000e+00 : f32
    %174 = vector.broadcast %cst_121 : f32 to vector<6x128xf32>
    %175 = arith.maximumf %173, %174 : vector<6x128xf32>
    %176 = arith.truncf %175 : vector<6x128xf32> to vector<6x128xbf16>
    %c0_122 = arith.constant 0 : index
    %c0_123 = arith.constant 0 : index
    %177 = vector.load %arg7[%c0_122, %c0_123] : memref<128x128xbf16, #tpu.memory_space<vmem>>, vector<128x128xbf16>
    %cst_124 = arith.constant dense<0.000000e+00> : vector<6x128xf32>
    %178 = tpu.matmul %176, %177, %cst_124 {dimension_numbers = #tpu.dot_dimension_numbers<[1], [0], [0], [1], [0, 0, 1, 1], [], []>} : vector<6x128xbf16>, vector<128x128xbf16>, vector<6x128xf32> -> vector<6x128xf32>
    %c0_125 = arith.constant 0 : index
    %c0_126 = arith.constant 0 : index
    %179 = vector.load %arg8[%c0_125, %c0_126] : memref<1x128xf32, #tpu.memory_space<vmem>>, vector<1x128xf32>
    %180 = vector.broadcast %179 : vector<1x128xf32> to vector<6x128xf32>
    %181 = arith.addf %178, %180 : vector<6x128xf32>
    %cst_127 = arith.constant 0.000000e+00 : f32
    %182 = vector.broadcast %cst_127 : f32 to vector<6x128xf32>
    %183 = arith.maximumf %181, %182 : vector<6x128xf32>
    %c0_128 = arith.constant 0 : index
    %c0_129 = arith.constant 0 : index
    %184 = vector.load %arg11[%c0_128, %c0_129] : memref<6x128xf32, #tpu.memory_space<vmem>>, vector<6x128xf32>
    tpu.vector_store %arg11[%c0_128, %c0_129], %183 {strides = array<i32>} : memref<6x128xf32, #tpu.memory_space<vmem>>, vector<6x128xf32>,
    %185 = vector.extract_strided_slice %183 {offsets = [0, 0], sizes = [3, 128], strides = [1, 1]} : vector<6x128xf32> to vector<3x128xf32>
    %cst_130 = arith.constant dense<0xFF800000> : vector<128xf32>
    %186 = vector.multi_reduction <maximumf>, %185, %cst_130 [0] : vector<3x128xf32> to vector<128xf32>
    %187 = vector.shape_cast %186 : vector<128xf32> to vector<1x128xf32>
    %188 = vector.extract_strided_slice %183 {offsets = [3, 0], sizes = [3, 128], strides = [1, 1]} : vector<6x128xf32> to vector<3x128xf32>
    %cst_131 = arith.constant dense<0xFF800000> : vector<128xf32>
    %189 = vector.multi_reduction <maximumf>, %188, %cst_131 [0] : vector<3x128xf32> to vector<128xf32>
    %190 = vector.shape_cast %189 : vector<128xf32> to vector<1x128xf32>
    %191 = tpu.concatenate %187, %190 in 0 : vector<1x128xf32>, vector<1x128xf32> -> vector<2x128xf32>
    %c0_132 = arith.constant 0 : index
    %c0_133 = arith.constant 0 : index
    %192 = vector.load %arg12[%c0_132, %c0_133] : memref<2x128xf32, #tpu.memory_space<vmem>>, vector<2x128xf32>
    tpu.vector_store %arg12[%c0_132, %c0_133], %191 {strides = array<i32>} : memref<2x128xf32, #tpu.memory_space<vmem>>, vector<2x128xf32>,
    %193 = arith.truncf %191 : vector<2x128xf32> to vector<2x128xbf16>
    %c0_134 = arith.constant 0 : index
    %c0_135 = arith.constant 0 : index
    %194 = vector.load %arg9[%c0_134, %c0_135] : memref<128x128xbf16, #tpu.memory_space<vmem>>, vector<128x128xbf16>
    %cst_136 = arith.constant dense<0.000000e+00> : vector<2x128xf32>
    %195 = tpu.matmul %193, %194, %cst_136 {dimension_numbers = #tpu.dot_dimension_numbers<[1], [0], [0], [1], [0, 0, 1, 1], [], []>} : vector<2x128xbf16>, vector<128x128xbf16>, vector<2x128xf32> -> vector<2x128xf32>
    %c0_137 = arith.constant 0 : index
    %c0_138 = arith.constant 0 : index
    %196 = vector.load %arg10[%c0_137, %c0_138] : memref<1x128xf32, #tpu.memory_space<vmem>>, vector<1x128xf32>
    %197 = vector.broadcast %196 : vector<1x128xf32> to vector<2x128xf32>
    %198 = arith.addf %195, %197 : vector<2x128xf32>
    %c0_139 = arith.constant 0 : index
    %c0_140 = arith.constant 0 : index
    %199 = vector.load %arg13[%c0_139, %c0_140] : memref<2x128xf32, #tpu.memory_space<vmem>>, vector<2x128xf32>
    tpu.vector_store %arg13[%c0_139, %c0_140], %198 {strides = array<i32>} : memref<2x128xf32, #tpu.memory_space<vmem>>, vector<2x128xf32>,
    return
  }
}

</mosaic_0001>

<llo_original>
// kernel: mvcnn_forward.1
$region0: #{mvcnn_forward.1}
  #allocation0 [shape = 'u32[]', space=smem, size = 0x4, offset = 0x4, fixed_abs, tag = 'smem constant byte address 0x4 - core index']
  #allocation1 [shape = 'u32[144,128]{1,0:T(1,128)}', space=vmem, size = 0x12000, scoped, tag = 'internal scratch']
  #allocation2 [shape = 'bf16[64,128]{1,0:T(16,128)(2,1)}', space=vmem, size = 0x4000, scoped, tag = 'scratch operand']
  %s0 = inlined_call_operand.vmem [shape: bf16[3,128,128], index: 0, kind: input, shape index: {}]
  %s1 = inlined_call_operand.vmem [shape: bf16[3,128,256], index: 1, kind: input, shape index: {}]
  %s2 = inlined_call_operand.vmem [shape: f32[1,128], index: 2, kind: input, shape index: {}]
  %s3 = inlined_call_operand.vmem [shape: bf16[3,128,256], index: 3, kind: input, shape index: {}]
  %s4 = inlined_call_operand.vmem [shape: f32[1,128], index: 4, kind: input, shape index: {}]
  %s5 = inlined_call_operand.vmem [shape: bf16[4,128,128], index: 5, kind: input, shape index: {}]
  %s6 = inlined_call_operand.vmem [shape: f32[1,128], index: 6, kind: input, shape index: {}]
  %s7 = inlined_call_operand.vmem [shape: bf16[128,128], index: 7, kind: input, shape index: {}]
  %s8 = inlined_call_operand.vmem [shape: f32[1,128], index: 8, kind: input, shape index: {}]
  %s9 = inlined_call_operand.vmem [shape: bf16[128,128], index: 9, kind: input, shape index: {}]
  %s10 = inlined_call_operand.vmem [shape: f32[1,128], index: 10, kind: input, shape index: {}]
  %s11 = inlined_call_operand.vmem [shape: f32[6,128], index: 11, kind: output, shape index: {0}]
  %s12 = inlined_call_operand.hbm [shape: f32[2,128], index: 12, kind: output, shape index: {1}]
  %s13 = inlined_call_operand.hbm [shape: f32[2,128], index: 13, kind: output, shape index: {2}]
  %14 = xla_tuple %s11, %s12, %s13
  %s15 = sld [smem:[#allocation0]]
  $region70: #{mvcnn_forward.1} parent=0
    _
  %s17 = ssub.s32 1, %s15
  %s18 = scalar_select 0, %s17, %s15
  $region1: #{mvcnn_forward.1} parent=0
    #allocation3 [shape = 'u8[1024]{0}', space=vmem, size = 0x400, scoped, tag = 'output window, operand 1, single buffered']
    #allocation4 [shape = 's32[1]{0}', space=sflag, size = 0x4, scoped, tag = 'scoped memory for mvcnn_forward.1']
    #allocation5 [shape = 'u8[1024]{0}', space=vmem, size = 0x400, scoped, tag = 'output window, operand 2, single buffered']
    #allocation6 [shape = 's32[1]{0}', space=sflag, size = 0x4, scoped, tag = 'scoped memory for mvcnn_forward.1']
    %19 = vsyncpa [#allocation4], 0
    %20 = vsyncpa [#allocation6], 0
    // Predicated region
    $region2: #{mvcnn_forward.1} parent=1 // pred_check
      _
    $region3: #{mvcnn_forward.1} parent=1 // pred_check_branch
      %22 = sbr.rel (0) target = $region5
    $region4: #{mvcnn_forward.1} parent=1 // pred_region
      _
    $region5: #{mvcnn_forward.1} parent=1 // pred_fallthru
      _
    // Predicated region
    $region6: #{mvcnn_forward.1} parent=1 // pred_check
      _
    $region7: #{mvcnn_forward.1} parent=1 // pred_check_branch
      %24 = sbr.rel (0) target = $region9
    $region8: #{mvcnn_forward.1} parent=1 // pred_region
      _
    $region9: #{mvcnn_forward.1} parent=1 // pred_fallthru
      _
    // Predicated region
    $region10: #{mvcnn_forward.1} parent=1 // pred_check
      _
    $region11: #{mvcnn_forward.1} parent=1 // pred_check_branch
      %26 = sbr.rel (0) target = $region13
    $region12: #{mvcnn_forward.1} parent=1 // pred_region
      _
    $region13: #{mvcnn_forward.1} parent=1 // pred_fallthru
      _
    // Predicated region
    $region14: #{mvcnn_forward.1} parent=1 // pred_check
      _
    $region15: #{mvcnn_forward.1} parent=1 // pred_check_branch
      %28 = sbr.rel (0) target = $region17
    $region16: #{mvcnn_forward.1} parent=1 // pred_region
      _
    $region17: #{mvcnn_forward.1} parent=1 // pred_fallthru
      _
    // Predicated region
    $region18: #{mvcnn_forward.1} parent=1 // pred_check
      _
    $region19: #{mvcnn_forward.1} parent=1 // pred_check_branch
      %30 = sbr.rel (0) target = $region21
    $region20: #{mvcnn_forward.1} parent=1 // pred_region
      _
    $region21: #{mvcnn_forward.1} parent=1 // pred_fallthru
      _
    // Predicated region
    $region22: #{mvcnn_forward.1} parent=1 // pred_check
      _
    $region23: #{mvcnn_forward.1} parent=1 // pred_check_branch
      %32 = sbr.rel (0) target = $region25
    $region24: #{mvcnn_forward.1} parent=1 // pred_region
      _
    $region25: #{mvcnn_forward.1} parent=1 // pred_fallthru
      _
    // Predicated region
    $region26: #{mvcnn_forward.1} parent=1 // pred_check
      _
    $region27: #{mvcnn_forward.1} parent=1 // pred_check_branch
      %34 = sbr.rel (0) target = $region29
    $region28: #{mvcnn_forward.1} parent=1 // pred_region
      _
    $region29: #{mvcnn_forward.1} parent=1 // pred_fallthru
      _
    // Predicated region
    $region30: #{mvcnn_forward.1} parent=1 // pred_check
      _
    $region31: #{mvcnn_forward.1} parent=1 // pred_check_branch
      %36 = sbr.rel (0) target = $region33
    $region32: #{mvcnn_forward.1} parent=1 // pred_region
      _
    $region33: #{mvcnn_forward.1} parent=1 // pred_fallthru
      _
    // Predicated region
    $region34: #{mvcnn_forward.1} parent=1 // pred_check
      _
    $region35: #{mvcnn_forward.1} parent=1 // pred_check_branch
      %38 = sbr.rel (0) target = $region37
    $region36: #{mvcnn_forward.1} parent=1 // pred_region
      _
    $region37: #{mvcnn_forward.1} parent=1 // pred_fallthru
      _
    // Predicated region
    $region38: #{mvcnn_forward.1} parent=1 // pred_check
      _
    $region39: #{mvcnn_forward.1} parent=1 // pred_check_branch
      %40 = sbr.rel (0) target = $region41
    $region40: #{mvcnn_forward.1} parent=1 // pred_region
      _
    $region41: #{mvcnn_forward.1} parent=1 // pred_fallthru
      _
    // Predicated region
    $region42: #{mvcnn_forward.1} parent=1 // pred_check
      _
    $region43: #{mvcnn_forward.1} parent=1 // pred_check_branch
      %42 = sbr.rel (0) target = $region45
    $region44: #{mvcnn_forward.1} parent=1 // pred_region
      _
    $region45: #{mvcnn_forward.1} parent=1 // pred_fallthru
      _
    %v44 = vld [vmem:[%s0] sm:$0xf]
    %v45 = vld [vmem:[%s0 + $0x4] sm:$0xf]
    %v46 = vld [vmem:[%s0 + $0x8] sm:$0xf]
    %v47 = vld [vmem:[%s0 + $0xc] sm:$0xf]
    %v48 = vld [vmem:[%s0 + $0x10] sm:$0xf]
    %v49 = vld [vmem:[%s0 + $0x14] sm:$0xf]
    %v50 = vld [vmem:[%s0 + $0x18] sm:$0xf]
    %v51 = vld [vmem:[%s0 + $0x1c] sm:$0xf]
    %v52 = vld [vmem:[%s0 + $0x20] sm:$0xf]
    %v53 = vld [vmem:[%s0 + $0x24] sm:$0xf]
    %v54 = vld [vmem:[%s0 + $0x28] sm:$0xf]
    %v55 = vld [vmem:[%s0 + $0x2c] sm:$0xf]
    %v56 = vld [vmem:[%s0 + $0x30] sm:$0xf]
    %v57 = vld [vmem:[%s0 + $0x34] sm:$0xf]
    %v58 = vld [vmem:[%s0 + $0x38] sm:$0xf]
    %v59 = vld [vmem:[%s0 + $0x3c] sm:$0xf]
    %v60 = vld [vmem:[%s1] sm:$0xff]
    %v61 = vld [vmem:[%s1 + $0x8] sm:$0xff]
    %v62 = vld [vmem:[%s1 + $0x10] sm:$0xff]
    %v63 = vld [vmem:[%s1 + $0x18] sm:$0xff]
    %v64 = vld [vmem:[%s1 + $0x20] sm:$0xff]
    %v65 = vld [vmem:[%s1 + $0x28] sm:$0xff]
    %v66 = vld [vmem:[%s1 + $0x30] sm:$0xff]
    %v67 = vld [vmem:[%s1 + $0x38] sm:$0xff]
    %v68 = vld [vmem:[%s1 + $0x40] sm:$0xff]
    %v69 = vld [vmem:[%s1 + $0x48] sm:$0xff]
    %v70 = vld [vmem:[%s1 + $0x50] sm:$0xff]
    %v71 = vld [vmem:[%s1 + $0x58] sm:$0xff]
    %v72 = vld [vmem:[%s1 + $0x60] sm:$0xff]
    %v73 = vld [vmem:[%s1 + $0x68] sm:$0xff]
    %v74 = vld [vmem:[%s1 + $0x70] sm:$0xff]
    %v75 = vld [vmem:[%s1 + $0x78] sm:$0xff]
    %s76 = scalar_lea.vmem %s0, 64
    %v77 = vld [vmem:[%s76] sm:$0xf]
    %v78 = vld [vmem:[%s76 + $0x4] sm:$0xf]
    %v79 = vld [vmem:[%s76 + $0x8] sm:$0xf]
    %v80 = vld [vmem:[%s76 + $0xc] sm:$0xf]
    %v81 = vld [vmem:[%s76 + $0x10] sm:$0xf]
    %v82 = vld [vmem:[%s76 + $0x14] sm:$0xf]
    %v83 = vld [vmem:[%s76 + $0x18] sm:$0xf]
    %v84 = vld [vmem:[%s76 + $0x1c] sm:$0xf]
    %v85 = vld [vmem:[%s76 + $0x20] sm:$0xf]
    %v86 = vld [vmem:[%s76 + $0x24] sm:$0xf]
    %v87 = vld [vmem:[%s76 + $0x28] sm:$0xf]
    %v88 = vld [vmem:[%s76 + $0x2c] sm:$0xf]
    %v89 = vld [vmem:[%s76 + $0x30] sm:$0xf]
    %v90 = vld [vmem:[%s76 + $0x34] sm:$0xf]
    %v91 = vld [vmem:[%s76 + $0x38] sm:$0xf]
    %v92 = vld [vmem:[%s76 + $0x3c] sm:$0xf]
    %s93 = scalar_lea.vmem %s1, 128
    %v94 = vld [vmem:[%s93] sm:$0xff]
    %v95 = vld [vmem:[%s93 + $0x8] sm:$0xff]
    %v96 = vld [vmem:[%s93 + $0x10] sm:$0xff]
    %v97 = vld [vmem:[%s93 + $0x18] sm:$0xff]
    %v98 = vld [vmem:[%s93 + $0x20] sm:$0xff]
    %v99 = vld [vmem:[%s93 + $0x28] sm:$0xff]
    %v100 = vld [vmem:[%s93 + $0x30] sm:$0xff]
    %v101 = vld [vmem:[%s93 + $0x38] sm:$0xff]
    %v102 = vld [vmem:[%s93 + $0x40] sm:$0xff]
    %v103 = vld [vmem:[%s93 + $0x48] sm:$0xff]
    %v104 = vld [vmem:[%s93 + $0x50] sm:$0xff]
    %v105 = vld [vmem:[%s93 + $0x58] sm:$0xff]
    %v106 = vld [vmem:[%s93 + $0x60] sm:$0xff]
    %v107 = vld [vmem:[%s93 + $0x68] sm:$0xff]
    %v108 = vld [vmem:[%s93 + $0x70] sm:$0xff]
    %v109 = vld [vmem:[%s93 + $0x78] sm:$0xff]
    %v126 = vunpack.c.l.b16 %v77
    %v127 = vunpack.c.l.b16 %v78
    %v128 = vunpack.c.l.b16 %v79
    %v129 = vunpack.c.l.b16 %v80
    %v130 = vunpack.c.l.b16 %v81
    %v131 = vunpack.c.l.b16 %v82
    %v132 = vunpack.c.l.b16 %v83
    %v133 = vunpack.c.l.b16 %v84
    %v134 = vunpack.c.l.b16 %v85
    %v135 = vunpack.c.l.b16 %v86
    %v136 = vunpack.c.l.b16 %v87
    %v137 = vunpack.c.l.b16 %v88
    %v138 = vunpack.c.l.b16 %v89
    %v139 = vunpack.c.l.b16 %v90
    %v140 = vunpack.c.l.b16 %v91
    %v141 = vunpack.c.l.b16 %v92
    %v142 = vpack.c.b16 %v127, %v126
    %v143 = vpack.c.b16 %v129, %v128
    %v144 = vpack.c.b16 %v131, %v130
    %v145 = vpack.c.b16 %v133, %v132
    %v146 = vpack.c.b16 %v135, %v134
    %v147 = vpack.c.b16 %v137, %v136
    %v148 = vpack.c.b16 %v139, %v138
    %v149 = vpack.c.b16 %v141, %v140
    %v174 = vunpack.c.l.b16 %v94
    %v175 = vunpack.c.h.b16 %v94
    %v176 = vunpack.c.l.b16 %v95
    %v177 = vunpack.c.h.b16 %v95
    %v178 = vunpack.c.l.b16 %v96
    %v179 = vunpack.c.h.b16 %v96
    %v180 = vunpack.c.l.b16 %v97
    %v181 = vunpack.c.h.b16 %v97
    %v182 = vunpack.c.l.b16 %v98
    %v183 = vunpack.c.h.b16 %v98
    %v184 = vunpack.c.l.b16 %v99
    %v185 = vunpack.c.h.b16 %v99
    %v186 = vunpack.c.l.b16 %v100
    %v187 = vunpack.c.h.b16 %v100
    %v188 = vunpack.c.l.b16 %v101
    %v189 = vunpack.c.h.b16 %v101
    %v190 = vunpack.c.l.b16 %v102
    %v191 = vunpack.c.h.b16 %v102
    %v192 = vunpack.c.l.b16 %v103
    %v193 = vunpack.c.h.b16 %v103
    %v194 = vunpack.c.l.b16 %v104
    %v195 = vunpack.c.h.b16 %v104
    %v196 = vunpack.c.l.b16 %v105
    %v197 = vunpack.c.h.b16 %v105
    %v198 = vunpack.c.l.b16 %v106
    %v199 = vunpack.c.h.b16 %v106
    %v200 = vunpack.c.l.b16 %v107
    %v201 = vunpack.c.h.b16 %v107
    %v202 = vunpack.c.l.b16 %v108
    %v203 = vunpack.c.h.b16 %v108
    %v204 = vunpack.c.l.b16 %v109
    %v205 = vunpack.c.h.b16 %v109
    %v206 = vpack.c.b16 %v176, %v174
    %v207 = vpack.c.b16 %v177, %v175
    %v208 = vpack.c.b16 %v180, %v178
    %v209 = vpack.c.b16 %v181, %v179
    %v210 = vpack.c.b16 %v184, %v182
    %v211 = vpack.c.b16 %v185, %v183
    %v212 = vpack.c.b16 %v188, %v186
    %v213 = vpack.c.b16 %v189, %v187
    %v214 = vpack.c.b16 %v192, %v190
    %v215 = vpack.c.b16 %v193, %v191
    %v216 = vpack.c.b16 %v196, %v194
    %v217 = vpack.c.b16 %v197, %v195
    %v218 = vpack.c.b16 %v200, %v198
    %v219 = vpack.c.b16 %v201, %v199
    %v220 = vpack.c.b16 %v204, %v202
    %v221 = vpack.c.b16 %v205, %v203
    %238 = vmatprep.subr.bf16.mxu0 %v207
    %239 = vmatpush1.bf16.msra.mxu0 %v206
    %240 = vmatprep.subr.bf16.mxu0 %v209
    %241 = vmatpush1.bf16.msra.mxu0 %v208
    %242 = vmatprep.subr.bf16.mxu0 %v211
    %243 = vmatpush1.bf16.msra.mxu0 %v210
    %244 = vmatprep.subr.bf16.mxu0 %v213
    %245 = vmatpush1.bf16.msra.mxu0 %v212
    %246 = vmatprep.subr.bf16.mxu0 %v215
    %247 = vmatpush1.bf16.msra.mxu0 %v214
    %248 = vmatprep.subr.bf16.mxu0 %v217
    %249 = vmatpush1.bf16.msra.mxu0 %v216
    %250 = vmatprep.subr.bf16.mxu0 %v219
    %251 = vmatpush1.bf16.msra.mxu0 %v218
    %252 = vmatprep.subr.bf16.mxu0 %v221
    %253 = vmatpush1.bf16.msra.mxu0 %v220
    %254 = vmatprep.subr.bf16.mxu0 0
    %255 = vmatpush1.bf16.msra.mxu0 0
    %256 = vmatprep.subr.bf16.mxu0 0
    %257 = vmatpush1.bf16.msra.mxu0 0
    %258 = vmatprep.subr.bf16.mxu0 0
    %259 = vmatpush1.bf16.msra.mxu0 0
    %260 = vmatprep.subr.bf16.mxu0 0
    %261 = vmatpush1.bf16.msra.mxu0 0
    %262 = vmatprep.subr.bf16.mxu0 0
    %263 = vmatpush1.bf16.msra.mxu0 0
    %264 = vmatprep.subr.bf16.mxu0 0
    %265 = vmatpush1.bf16.msra.mxu0 0
    %266 = vmatprep.subr.bf16.mxu0 0
    %267 = vmatpush1.bf16.msra.mxu0 0
    %268 = vmatprep.subr.bf16.mxu0 0
    %269 = vmatpush1.bf16.msra.mxu0 0
    %270 = vmatprep.mubr.bf16.mxu0 0
    %271 = vmatmul.mubr.bf16.gmra.mrb[0].mxu0 %v142
    %v272 = vpop.f32.mrb[0].mxu0
    %v273 = vadd.f32 0.0, %v272
    %v274 = vpop.f32.mrb[0].mxu0
    %v275 = vadd.f32 0.0, %v274
    %v276 = vpop.f32.mrb[0].mxu0
    %v277 = vadd.f32 0.0, %v276
    %v278 = vpop.f32.mrb[0].mxu0
    %v279 = vadd.f32 0.0, %v278
    %280 = vmatprep.mubr.bf16.mxu0 0
    %281 = vmatmul.mubr.bf16.gmra.mrb[0].mxu0 %v143
    %v282 = vpop.f32.mrb[0].mxu0
    %v283 = vadd.f32 0.0, %v282
    %v284 = vpop.f32.mrb[0].mxu0
    %v285 = vadd.f32 0.0, %v284
    %v286 = vpop.f32.mrb[0].mxu0
    %v287 = vadd.f32 0.0, %v286
    %v288 = vpop.f32.mrb[0].mxu0
    %v289 = vadd.f32 0.0, %v288
    %290 = vmatprep.mubr.bf16.mxu0 0
    %291 = vmatmul.mubr.bf16.gmra.mrb[0].mxu0 %v144
    %v292 = vpop.f32.mrb[0].mxu0
    %v293 = vadd.f32 0.0, %v292
    %v294 = vpop.f32.mrb[0].mxu0
    %v295 = vadd.f32 0.0, %v294
    %v296 = vpop.f32.mrb[0].mxu0
    %v297 = vadd.f32 0.0, %v296
    %v298 = vpop.f32.mrb[0].mxu0
    %v299 = vadd.f32 0.0, %v298
    %300 = vmatprep.mubr.bf16.mxu0 0
    %301 = vmatmul.mubr.bf16.gmra.mrb[0].mxu0 %v145
    %v302 = vpop.f32.mrb[0].mxu0
    %v303 = vadd.f32 0.0, %v302
    %v304 = vpop.f32.mrb[0].mxu0
    %v305 = vadd.f32 0.0, %v304
    %v306 = vpop.f32.mrb[0].mxu0
    %v307 = vadd.f32 0.0, %v306
    %v308 = vpop.f32.mrb[0].mxu0
    %v309 = vadd.f32 0.0, %v308
    %310 = vmatprep.mubr.bf16.mxu0 0
    %311 = vmatmul.mubr.bf16.gmra.mrb[0].mxu0 %v146
    %v312 = vpop.f32.mrb[0].mxu0
    %v313 = vadd.f32 0.0, %v312
    %v314 = vpop.f32.mrb[0].mxu0
    %v315 = vadd.f32 0.0, %v314
    %v316 = vpop.f32.mrb[0].mxu0
    %v317 = vadd.f32 0.0, %v316
    %v318 = vpop.f32.mrb[0].mxu0
    %v319 = vadd.f32 0.0, %v318
    %320 = vmatprep.mubr.bf16.mxu0 0
    %321 = vmatmul.mubr.bf16.gmra.mrb[0].mxu0 %v147
    %v322 = vpop.f32.mrb[0].mxu0
    %v323 = vadd.f32 0.0, %v322
    %v324 = vpop.f32.mrb[0].mxu0
    %v325 = vadd.f32 0.0, %v324
    %v326 = vpop.f32.mrb[0].mxu0
    %v327 = vadd.f32 0.0, %v326
    %v328 = vpop.f32.mrb[0].mxu0
    %v329 = vadd.f32 0.0, %v328
    %330 = vmatprep.mubr.bf16.mxu0 0
    %331 = vmatmul.mubr.bf16.gmra.mrb[0].mxu0 %v148
    %v332 = vpop.f32.mrb[0].mxu0
    %v333 = vadd.f32 0.0, %v332
    %v334 = vpop.f32.mrb[0].mxu0
    %v335 = vadd.f32 0.0, %v334
    %v336 = vpop.f32.mrb[0].mxu0
    %v337 = vadd.f32 0.0, %v336
    %v338 = vpop.f32.mrb[0].mxu0
    %v339 = vadd.f32 0.0, %v338
    %340 = vmatprep.mubr.bf16.mxu0 0
    %341 = vmatmul.mubr.bf16.gmra.mrb[0].mxu0 %v149
    %v342 = vpop.f32.mrb[0].mxu0
    %v343 = vadd.f32 0.0, %v342
    %v344 = vpop.f32.mrb[0].mxu0
    %v345 = vadd.f32 0.0, %v344
    %v346 = vpop.f32.mrb[0].mxu0
    %v347 = vadd.f32 0.0, %v346
    %v348 = vpop.f32.mrb[0].mxu0
    %v349 = vadd.f32 0.0, %v348
    %350 = vdwg.mxu0
    %v367 = vunpack.c.l.b16 %v44
    %v368 = vunpack.c.l.b16 %v45
    %v369 = vunpack.c.l.b16 %v46
    %v370 = vunpack.c.l.b16 %v47
    %v371 = vunpack.c.l.b16 %v48
    %v372 = vunpack.c.l.b16 %v49
    %v373 = vunpack.c.l.b16 %v50
    %v374 = vunpack.c.l.b16 %v51
    %v375 = vunpack.c.l.b16 %v52
    %v376 = vunpack.c.l.b16 %v53
    %v377 = vunpack.c.l.b16 %v54
    %v378 = vunpack.c.l.b16 %v55
    %v379 = vunpack.c.l.b16 %v56
    %v380 = vunpack.c.l.b16 %v57
    %v381 = vunpack.c.l.b16 %v58
    %v382 = vunpack.c.l.b16 %v59
    %v383 = vpack.c.b16 %v368, %v367
    %v384 = vpack.c.b16 %v370, %v369
    %v385 = vpack.c.b16 %v372, %v371
    %v386 = vpack.c.b16 %v374, %v373
    %v387 = vpack.c.b16 %v376, %v375
    %v388 = vpack.c.b16 %v378, %v377
    %v389 = vpack.c.b16 %v380, %v379
    %v390 = vpack.c.b16 %v382, %v381
    %v415 = vunpack.c.l.b16 %v60
    %v416 = vunpack.c.h.b16 %v60
    %v417 = vunpack.c.l.b16 %v61
    %v418 = vunpack.c.h.b16 %v61
    %v419 = vunpack.c.l.b16 %v62
    %v420 = vunpack.c.h.b16 %v62
    %v421 = vunpack.c.l.b16 %v63
    %v422 = vunpack.c.h.b16 %v63
    %v423 = vunpack.c.l.b16 %v64
    %v424 = vunpack.c.h.b16 %v64
    %v425 = vunpack.c.l.b16 %v65
    %v426 = vunpack.c.h.b16 %v65
    %v427 = vunpack.c.l.b16 %v66
    %v428 = vunpack.c.h.b16 %v66
    %v429 = vunpack.c.l.b16 %v67
    %v430 = vunpack.c.h.b16 %v67
    %v431 = vunpack.c.l.b16 %v68
    %v432 = vunpack.c.h.b16 %v68
    %v433 = vunpack.c.l.b16 %v69
    %v434 = vunpack.c.h.b16 %v69
    %v435 = vunpack.c.l.b16 %v70
    %v436 = vunpack.c.h.b16 %v70
    %v437 = vunpack.c.l.b16 %v71
    %v438 = vunpack.c.h.b16 %v71
    %v439 = vunpack.c.l.b16 %v72
    %v440 = vunpack.c.h.b16 %v72
    %v441 = vunpack.c.l.b16 %v73
    %v442 = vunpack.c.h.b16 %v73
    %v443 = vunpack.c.l.b16 %v74
    %v444 = vunpack.c.h.b16 %v74
    %v445 = vunpack.c.l.b16 %v75
    %v446 = vunpack.c.h.b16 %v75
    %v447 = vpack.c.b16 %v417, %v415
    %v448 = vpack.c.b16 %v418, %v416
    %v449 = vpack.c.b16 %v421, %v419
    %v450 = vpack.c.b16 %v422, %v420
    %v451 = vpack.c.b16 %v425, %v423
    %v452 = vpack.c.b16 %v426, %v424
    %v453 = vpack.c.b16 %v429, %v427
    %v454 = vpack.c.b16 %v430, %v428
    %v455 = vpack.c.b16 %v433, %v431
    %v456 = vpack.c.b16 %v434, %v432
    %v457 = vpack.c.b16 %v437, %v435
    %v458 = vpack.c.b16 %v438, %v436
    %v459 = vpack.c.b16 %v441, %v439
    %v460 = vpack.c.b16 %v442, %v440
    %v461 = vpack.c.b16 %v445, %v443
    %v462 = vpack.c.b16 %v446, %v444
    %479 = vmatprep.subr.bf16.mxu0 %v448
    %480 = vmatpush1.bf16.msra.mxu0 %v447
    %481 = vmatprep.subr.bf16.mxu0 %v450
    %482 = vmatpush1.bf16.msra.mxu0 %v449
    %483 = vmatprep.subr.bf16.mxu0 %v452
    %484 = vmatpush1.bf16.msra.mxu0 %v451
    %485 = vmatprep.subr.bf16.mxu0 %v454
    %486 = vmatpush1.bf16.msra.mxu0 %v453
    %487 = vmatprep.subr.bf16.mxu0 %v456
    %488 = vmatpush1.bf16.msra.mxu0 %v455
    %489 = vmatprep.subr.bf16.mxu0 %v458
    %490 = vmatpush1.bf16.msra.mxu0 %v457
    %491 = vmatprep.subr.bf16.mxu0 %v460
    %492 = vmatpush1.bf16.msra.mxu0 %v459
    %493 = vmatprep.subr.bf16.mxu0 %v462
    %494 = vmatpush1.bf16.msra.mxu0 %v461
    %495 = vmatprep.subr.bf16.mxu0 0
    %496 = vmatpush1.bf16.msra.mxu0 0
    %497 = vmatprep.subr.bf16.mxu0 0
    %498 = vmatpush1.bf16.msra.mxu0 0
    %499 = vmatprep.subr.bf16.mxu0 0
    %500 = vmatpush1.bf16.msra.mxu0 0
    %501 = vmatprep.subr.bf16.mxu0 0
    %502 = vmatpush1.bf16.msra.mxu0 0
    %503 = vmatprep.subr.bf16.mxu0 0
    %504 = vmatpush1.bf16.msra.mxu0 0
    %505 = vmatprep.subr.bf16.mxu0 0
    %506 = vmatpush1.bf16.msra.mxu0 0
    %507 = vmatprep.subr.bf16.mxu0 0
    %508 = vmatpush1.bf16.msra.mxu0 0
    %509 = vmatprep.subr.bf16.mxu0 0
    %510 = vmatpush1.bf16.msra.mxu0 0
    %511 = vmatprep.mubr.bf16.mxu0 0
    %512 = vmatmul.mubr.bf16.gmra.mrb[0].mxu0 %v383
    %v513 = vpop.f32.mrb[0].mxu0
    %v514 = vadd.f32 %v273, %v513
    %v515 = vpop.f32.mrb[0].mxu0
    %v516 = vadd.f32 %v275, %v515
    %v517 = vpop.f32.mrb[0].mxu0
    %v518 = vadd.f32 %v277, %v517
    %v519 = vpop.f32.mrb[0].mxu0
    %v520 = vadd.f32 %v279, %v519
    %521 = vmatprep.mubr.bf16.mxu0 0
    %522 = vmatmul.mubr.bf16.gmra.mrb[0].mxu0 %v384
    %v523 = vpop.f32.mrb[0].mxu0
    %v524 = vadd.f32 %v283, %v523
    %v525 = vpop.f32.mrb[0].mxu0
    %v526 = vadd.f32 %v285, %v525
    %v527 = vpop.f32.mrb[0].mxu0
    %v528 = vadd.f32 %v287, %v527
    %v529 = vpop.f32.mrb[0].mxu0
    %v530 = vadd.f32 %v289, %v529
    %531 = vmatprep.mubr.bf16.mxu0 0
    %532 = vmatmul.mubr.bf16.gmra.mrb[0].mxu0 %v385
    %v533 = vpop.f32.mrb[0].mxu0
    %v534 = vadd.f32 %v293, %v533
    %v535 = vpop.f32.mrb[0].mxu0
    %v536 = vadd.f32 %v295, %v535
    %v537 = vpop.f32.mrb[0].mxu0
    %v538 = vadd.f32 %v297, %v537
    %v539 = vpop.f32.mrb[0].mxu0
    %v540 = vadd.f32 %v299, %v539
    %541 = vmatprep.mubr.bf16.mxu0 0
    %542 = vmatmul.mubr.bf16.gmra.mrb[0].mxu0 %v386
    %v543 = vpop.f32.mrb[0].mxu0
    %v544 = vadd.f32 %v303, %v543
    %v545 = vpop.f32.mrb[0].mxu0
    %v546 = vadd.f32 %v305, %v545
    %v547 = vpop.f32.mrb[0].mxu0
    %v548 = vadd.f32 %v307, %v547
    %v549 = vpop.f32.mrb[0].mxu0
    %v550 = vadd.f32 %v309, %v549
    %551 = vmatprep.mubr.bf16.mxu0 0
    %552 = vmatmul.mubr.bf16.gmra.mrb[0].mxu0 %v387
    %v553 = vpop.f32.mrb[0].mxu0
    %v554 = vadd.f32 %v313, %v553
    %v555 = vpop.f32.mrb[0].mxu0
    %v556 = vadd.f32 %v315, %v555
    %v557 = vpop.f32.mrb[0].mxu0
    %v558 = vadd.f32 %v317, %v557
    %v559 = vpop.f32.mrb[0].mxu0
    %v560 = vadd.f32 %v319, %v559
    %561 = vmatprep.mubr.bf16.mxu0 0
    %562 = vmatmul.mubr.bf16.gmra.mrb[0].mxu0 %v388
    %v563 = vpop.f32.mrb[0].mxu0
    %v564 = vadd.f32 %v323, %v563
    %v565 = vpop.f32.mrb[0].mxu0
    %v566 = vadd.f32 %v325, %v565
    %v567 = vpop.f32.mrb[0].mxu0
    %v568 = vadd.f32 %v327, %v567
    %v569 = vpop.f32.mrb[0].mxu0
    %v570 = vadd.f32 %v329, %v569
    %571 = vmatprep.mubr.bf16.mxu0 0
    %572 = vmatmul.mubr.bf16.gmra.mrb[0].mxu0 %v389
    %v573 = vpop.f32.mrb[0].mxu0
    %v574 = vadd.f32 %v333, %v573
    %v575 = vpop.f32.mrb[0].mxu0
    %v576 = vadd.f32 %v335, %v575
    %v577 = vpop.f32.mrb[0].mxu0
    %v578 = vadd.f32 %v337, %v577
    %v579 = vpop.f32.mrb[0].mxu0
    %v580 = vadd.f32 %v339, %v579
    %581 = vmatprep.mubr.bf16.mxu0 0
    %582 = vmatmul.mubr.bf16.gmra.mrb[0].mxu0 %v390
    %v583 = vpop.f32.mrb[0].mxu0
    %v584 = vadd.f32 %v343, %v583
    %v585 = vpop.f32.mrb[0].mxu0
    %v586 = vadd.f32 %v345, %v585
    %v587 = vpop.f32.mrb[0].mxu0
    %v588 = vadd.f32 %v347, %v587
    %v589 = vpop.f32.mrb[0].mxu0
    %v590 = vadd.f32 %v349, %v589
    %591 = vdwg.mxu0
    %s592 = scalar_lea.vmem %s0, 128
    %v593 = vld [vmem:[%s592] sm:$0xf]
    %v594 = vld [vmem:[%s592 + $0x4] sm:$0xf]
    %v595 = vld [vmem:[%s592 + $0x8] sm:$0xf]
    %v596 = vld [vmem:[%s592 + $0xc] sm:$0xf]
    %v597 = vld [vmem:[%s592 + $0x10] sm:$0xf]
    %v598 = vld [vmem:[%s592 + $0x14] sm:$0xf]
    %v599 = vld [vmem:[%s592 + $0x18] sm:$0xf]
    %v600 = vld [vmem:[%s592 + $0x1c] sm:$0xf]
    %v601 = vld [vmem:[%s592 + $0x20] sm:$0xf]
    %v602 = vld [vmem:[%s592 + $0x24] sm:$0xf]
    %v603 = vld [vmem:[%s592 + $0x28] sm:$0xf]
    %v604 = vld [vmem:[%s592 + $0x2c] sm:$0xf]
    %v605 = vld [vmem:[%s592 + $0x30] sm:$0xf]
    %v606 = vld [vmem:[%s592 + $0x34] sm:$0xf]
    %v607 = vld [vmem:[%s592 + $0x38] sm:$0xf]
    %v608 = vld [vmem:[%s592 + $0x3c] sm:$0xf]
    %s609 = scalar_lea.vmem %s1, 256
    %v610 = vld [vmem:[%s609] sm:$0xff]
    %v611 = vld [vmem:[%s609 + $0x8] sm:$0xff]
    %v612 = vld [vmem:[%s609 + $0x10] sm:$0xff]
    %v613 = vld [vmem:[%s609 + $0x18] sm:$0xff]
    %v614 = vld [vmem:[%s609 + $0x20] sm:$0xff]
    %v615 = vld [vmem:[%s609 + $0x28] sm:$0xff]
    %v616 = vld [vmem:[%s609 + $0x30] sm:$0xff]
    %v617 = vld [vmem:[%s609 + $0x38] sm:$0xff]
    %v618 = vld [vmem:[%s609 + $0x40] sm:$0xff]
    %v619 = vld [vmem:[%s609 + $0x48] sm:$0xff]
    %v620 = vld [vmem:[%s609 + $0x50] sm:$0xff]
    %v621 = vld [vmem:[%s609 + $0x58] sm:$0xff]
    %v622 = vld [vmem:[%s609 + $0x60] sm:$0xff]
    %v623 = vld [vmem:[%s609 + $0x68] sm:$0xff]
    %v624 = vld [vmem:[%s609 + $0x70] sm:$0xff]
    %v625 = vld [vmem:[%s609 + $0x78] sm:$0xff]
    %v642 = vunpack.c.l.b16 %v593
    %v643 = vunpack.c.l.b16 %v594
    %v644 = vunpack.c.l.b16 %v595
    %v645 = vunpack.c.l.b16 %v596
    %v646 = vunpack.c.l.b16 %v597
    %v647 = vunpack.c.l.b16 %v598
    %v648 = vunpack.c.l.b16 %v599
    %v649 = vunpack.c.l.b16 %v600
    %v650 = vunpack.c.l.b16 %v601
    %v651 = vunpack.c.l.b16 %v602
    %v652 = vunpack.c.l.b16 %v603
    %v653 = vunpack.c.l.b16 %v604
    %v654 = vunpack.c.l.b16 %v605
    %v655 = vunpack.c.l.b16 %v606
    %v656 = vunpack.c.l.b16 %v607
    %v657 = vunpack.c.l.b16 %v608
    %v658 = vpack.c.b16 %v643, %v642
    %v659 = vpack.c.b16 %v645, %v644
    %v660 = vpack.c.b16 %v647, %v646
    %v661 = vpack.c.b16 %v649, %v648
    %v662 = vpack.c.b16 %v651, %v650
    %v663 = vpack.c.b16 %v653, %v652
    %v664 = vpack.c.b16 %v655, %v654
    %v665 = vpack.c.b16 %v657, %v656
    %v690 = vunpack.c.l.b16 %v610
    %v691 = vunpack.c.h.b16 %v610
    %v692 = vunpack.c.l.b16 %v611
    %v693 = vunpack.c.h.b16 %v611
    %v694 = vunpack.c.l.b16 %v612
    %v695 = vunpack.c.h.b16 %v612
    %v696 = vunpack.c.l.b16 %v613
    %v697 = vunpack.c.h.b16 %v613
    %v698 = vunpack.c.l.b16 %v614
    %v699 = vunpack.c.h.b16 %v614
    %v700 = vunpack.c.l.b16 %v615
    %v701 = vunpack.c.h.b16 %v615
    %v702 = vunpack.c.l.b16 %v616
    %v703 = vunpack.c.h.b16 %v616
    %v704 = vunpack.c.l.b16 %v617
    %v705 = vunpack.c.h.b16 %v617
    %v706 = vunpack.c.l.b16 %v618
    %v707 = vunpack.c.h.b16 %v618
    %v708 = vunpack.c.l.b16 %v619
    %v709 = vunpack.c.h.b16 %v619
    %v710 = vunpack.c.l.b16 %v620
    %v711 = vunpack.c.h.b16 %v620
    %v712 = vunpack.c.l.b16 %v621
    %v713 = vunpack.c.h.b16 %v621
    %v714 = vunpack.c.l.b16 %v622
    %v715 = vunpack.c.h.b16 %v622
    %v716 = vunpack.c.l.b16 %v623
    %v717 = vunpack.c.h.b16 %v623
    %v718 = vunpack.c.l.b16 %v624
    %v719 = vunpack.c.h.b16 %v624
    %v720 = vunpack.c.l.b16 %v625
    %v721 = vunpack.c.h.b16 %v625
    %v722 = vpack.c.b16 %v692, %v690
    %v723 = vpack.c.b16 %v693, %v691
    %v724 = vpack.c.b16 %v696, %v694
    %v725 = vpack.c.b16 %v697, %v695
    %v726 = vpack.c.b16 %v700, %v698
    %v727 = vpack.c.b16 %v701, %v699
    %v728 = vpack.c.b16 %v704, %v702
    %v729 = vpack.c.b16 %v705, %v703
    %v730 = vpack.c.b16 %v708, %v706
    %v731 = vpack.c.b16 %v709, %v707
    %v732 = vpack.c.b16 %v712, %v710
    %v733 = vpack.c.b16 %v713, %v711
    %v734 = vpack.c.b16 %v716, %v714
    %v735 = vpack.c.b16 %v717, %v715
    %v736 = vpack.c.b16 %v720, %v718
    %v737 = vpack.c.b16 %v721, %v719
    %754 = vmatprep.subr.bf16.mxu0 %v723
    %755 = vmatpush1.bf16.msra.mxu0 %v722
    %756 = vmatprep.subr.bf16.mxu0 %v725
    %757 = vmatpush1.bf16.msra.mxu0 %v724
    %758 = vmatprep.subr.bf16.mxu0 %v727
    %759 = vmatpush1.bf16.msra.mxu0 %v726
    %760 = vmatprep.subr.bf16.mxu0 %v729
    %761 = vmatpush1.bf16.msra.mxu0 %v728
    %762 = vmatprep.subr.bf16.mxu0 %v731
    %763 = vmatpush1.bf16.msra.mxu0 %v730
    %764 = vmatprep.subr.bf16.mxu0 %v733
    %765 = vmatpush1.bf16.msra.mxu0 %v732
    %766 = vmatprep.subr.bf16.mxu0 %v735
    %767 = vmatpush1.bf16.msra.mxu0 %v734
    %768 = vmatprep.subr.bf16.mxu0 %v737
    %769 = vmatpush1.bf16.msra.mxu0 %v736
    %770 = vmatprep.subr.bf16.mxu0 0
    %771 = vmatpush1.bf16.msra.mxu0 0
    %772 = vmatprep.subr.bf16.mxu0 0
    %773 = vmatpush1.bf16.msra.mxu0 0
    %774 = vmatprep.subr.bf16.mxu0 0
    %775 = vmatpush1.bf16.msra.mxu0 0
    %776 = vmatprep.subr.bf16.mxu0 0
    %777 = vmatpush1.bf16.msra.mxu0 0
    %778 = vmatprep.subr.bf16.mxu0 0
    %779 = vmatpush1.bf16.msra.mxu0 0
    %780 = vmatprep.subr.bf16.mxu0 0
    %781 = vmatpush1.bf16.msra.mxu0 0
    %782 = vmatprep.subr.bf16.mxu0 0
    %783 = vmatpush1.bf16.msra.mxu0 0
    %784 = vmatprep.subr.bf16.mxu0 0
    %785 = vmatpush1.bf16.msra.mxu0 0
    %786 = vmatprep.mubr.bf16.mxu0 0
    %787 = vmatmul.mubr.bf16.gmra.mrb[0].mxu0 %v658
    %v788 = vpop.f32.mrb[0].mxu0
    %v789 = vadd.f32 0.0, %v788
    %v790 = vpop.f32.mrb[0].mxu0
    %v791 = vadd.f32 0.0, %v790
    %v792 = vpop.f32.mrb[0].mxu0
    %v793 = vadd.f32 0.0, %v792
    %v794 = vpop.f32.mrb[0].mxu0
    %v795 = vadd.f32 0.0, %v794
    %796 = vmatprep.mubr.bf16.mxu0 0
    %797 = vmatmul.mubr.bf16.gmra.mrb[0].mxu0 %v659
    %v798 = vpop.f32.mrb[0].mxu0
    %v799 = vadd.f32 0.0, %v798
    %v800 = vpop.f32.mrb[0].mxu0
    %v801 = vadd.f32 0.0, %v800
    %v802 = vpop.f32.mrb[0].mxu0
    %v803 = vadd.f32 0.0, %v802
    %v804 = vpop.f32.mrb[0].mxu0
    %v805 = vadd.f32 0.0, %v804
    %806 = vmatprep.mubr.bf16.mxu0 0
    %807 = vmatmul.mubr.bf16.gmra.mrb[0].mxu0 %v660
    %v808 = vpop.f32.mrb[0].mxu0
    %v809 = vadd.f32 0.0, %v808
    %v810 = vpop.f32.mrb[0].mxu0
    %v811 = vadd.f32 0.0, %v810
    %v812 = vpop.f32.mrb[0].mxu0
    %v813 = vadd.f32 0.0, %v812
    %v814 = vpop.f32.mrb[0].mxu0
    %v815 = vadd.f32 0.0, %v814
    %816 = vmatprep.mubr.bf16.mxu0 0
    %817 = vmatmul.mubr.bf16.gmra.mrb[0].mxu0 %v661
    %v818 = vpop.f32.mrb[0].mxu0
    %v819 = vadd.f32 0.0, %v818
    %v820 = vpop.f32.mrb[0].mxu0
    %v821 = vadd.f32 0.0, %v820
    %v822 = vpop.f32.mrb[0].mxu0
    %v823 = vadd.f32 0.0, %v822
    %v824 = vpop.f32.mrb[0].mxu0
    %v825 = vadd.f32 0.0, %v824
    %826 = vmatprep.mubr.bf16.mxu0 0
    %827 = vmatmul.mubr.bf16.gmra.mrb[0].mxu0 %v662
    %v828 = vpop.f32.mrb[0].mxu0
    %v829 = vadd.f32 0.0, %v828
    %v830 = vpop.f32.mrb[0].mxu0
    %v831 = vadd.f32 0.0, %v830
    %v832 = vpop.f32.mrb[0].mxu0
    %v833 = vadd.f32 0.0, %v832
    %v834 = vpop.f32.mrb[0].mxu0
    %v835 = vadd.f32 0.0, %v834
    %836 = vmatprep.mubr.bf16.mxu0 0
    %837 = vmatmul.mubr.bf16.gmra.mrb[0].mxu0 %v663
    %v838 = vpop.f32.mrb[0].mxu0
    %v839 = vadd.f32 0.0, %v838
    %v840 = vpop.f32.mrb[0].mxu0
    %v841 = vadd.f32 0.0, %v840
    %v842 = vpop.f32.mrb[0].mxu0
    %v843 = vadd.f32 0.0, %v842
    %v844 = vpop.f32.mrb[0].mxu0
    %v845 = vadd.f32 0.0, %v844
    %846 = vmatprep.mubr.bf16.mxu0 0
    %847 = vmatmul.mubr.bf16.gmra.mrb[0].mxu0 %v664
    %v848 = vpop.f32.mrb[0].mxu0
    %v849 = vadd.f32 0.0, %v848
    %v850 = vpop.f32.mrb[0].mxu0
    %v851 = vadd.f32 0.0, %v850
    %v852 = vpop.f32.mrb[0].mxu0
    %v853 = vadd.f32 0.0, %v852
    %v854 = vpop.f32.mrb[0].mxu0
    %v855 = vadd.f32 0.0, %v854
    %856 = vmatprep.mubr.bf16.mxu0 0
    %857 = vmatmul.mubr.bf16.gmra.mrb[0].mxu0 %v665
    %v858 = vpop.f32.mrb[0].mxu0
    %v859 = vadd.f32 0.0, %v858
    %v860 = vpop.f32.mrb[0].mxu0
    %v861 = vadd.f32 0.0, %v860
    %v862 = vpop.f32.mrb[0].mxu0
    %v863 = vadd.f32 0.0, %v862
    %v864 = vpop.f32.mrb[0].mxu0
    %v865 = vadd.f32 0.0, %v864
    %866 = vdwg.mxu0
    %v867 = vadd.f32 %v514, %v789
    %v868 = vadd.f32 %v516, %v791
    %v869 = vadd.f32 %v518, %v793
    %v870 = vadd.f32 %v520, %v795
    %v871 = vadd.f32 %v524, %v799
    %v872 = vadd.f32 %v526, %v801
    %v873 = vadd.f32 %v528, %v803
    %v874 = vadd.f32 %v530, %v805
    %v875 = vadd.f32 %v534, %v809
    %v876 = vadd.f32 %v536, %v811
    %v877 = vadd.f32 %v538, %v813
    %v878 = vadd.f32 %v540, %v815
    %v879 = vadd.f32 %v544, %v819
    %v880 = vadd.f32 %v546, %v821
    %v881 = vadd.f32 %v548, %v823
    %v882 = vadd.f32 %v550, %v825
    %v883 = vadd.f32 %v554, %v829
    %v884 = vadd.f32 %v556, %v831
    %v885 = vadd.f32 %v558, %v833
    %v886 = vadd.f32 %v560, %v835
    %v887 = vadd.f32 %v564, %v839
    %v888 = vadd.f32 %v566, %v841
    %v889 = vadd.f32 %v568, %v843
    %v890 = vadd.f32 %v570, %v845
    %v891 = vadd.f32 %v574, %v849
    %v892 = vadd.f32 %v576, %v851
    %v893 = vadd.f32 %v578, %v853
    %v894 = vadd.f32 %v580, %v855
    %v895 = vadd.f32 %v584, %v859
    %v896 = vadd.f32 %v586, %v861
    %v897 = vadd.f32 %v588, %v863
    %v898 = vadd.f32 %v590, %v865
    %v899 = vmax.f32 %v867, %v883
    %v900 = vmax.f32 %v868, %v884
    %v901 = vmax.f32 %v869, %v885
    %v902 = vmax.f32 %v870, %v886
    %v903 = vmax.f32 %v871, %v887
    %v904 = vmax.f32 %v872, %v888
    %v905 = vmax.f32 %v873, %v889
    %v906 = vmax.f32 %v874, %v890
    %v907 = vmax.f32 %v875, %v891
    %v908 = vmax.f32 %v876, %v892
    %v909 = vmax.f32 %v877, %v893
    %v910 = vmax.f32 %v878, %v894
    %v911 = vmax.f32 %v879, %v895
    %v912 = vmax.f32 %v880, %v896
    %v913 = vmax.f32 %v881, %v897
    %v914 = vmax.f32 %v882, %v898
    %v915 = vmax.f32 %v899, %v900
    %v916 = vmax.f32 %v901, %v902
    %v917 = vmax.f32 %v903, %v904
    %v918 = vmax.f32 %v905, %v906
    %v919 = vmax.f32 %v907, %v908
    %v920 = vmax.f32 %v909, %v910
    %v921 = vmax.f32 %v911, %v912
    %v922 = vmax.f32 %v913, %v914
    %v923 = vlaneseq
    %v924 = vshrl.u32 %v923, 7
    %v925 = vadd.s32 %v924, 8
    %v926 = vadd.s32 %v924, 16
    %v927 = vadd.s32 %v924, 24
    %v928 = vadd.s32 %v924, 32
    %v929 = vadd.s32 %v924, 40
    %v930 = vadd.s32 %v924, 48
    %v931 = vadd.s32 %v924, 56
    %vm932 = vcmp.ge.s32.totalorder %v924, 6
    %vm933 = vcmp.ge.s32.totalorder %v925, 6
    %vm934 = vcmp.ge.s32.totalorder %v926, 6
    %vm935 = vcmp.ge.s32.totalorder %v927, 6
    %vm936 = vcmp.ge.s32.totalorder %v928, 6
    %vm937 = vcmp.ge.s32.totalorder %v929, 6
    %vm938 = vcmp.ge.s32.totalorder %v930, 6
    %vm939 = vcmp.ge.s32.totalorder %v931, 6
    %vm940 = vcmp.lt.s32.totalorder %v924, 54
    %vm941 = vcmp.lt.s32.totalorder %v925, 54
    %vm942 = vcmp.lt.s32.totalorder %v926, 54
    %vm943 = vcmp.lt.s32.totalorder %v927, 54
    %vm944 = vcmp.lt.s32.totalorder %v928, 54
    %vm945 = vcmp.lt.s32.totalorder %v929, 54
    %vm946 = vcmp.lt.s32.totalorder %v930, 54
    %vm947 = vcmp.lt.s32.totalorder %v931, 54
    %vm948 = vmand %vm932, %vm940
    %vm949 = vmand %vm933, %vm941
    %vm950 = vmand %vm934, %vm942
    %vm951 = vmand %vm935, %vm943
    %vm952 = vmand %vm936, %vm944
    %vm953 = vmand %vm937, %vm945
    %vm954 = vmand %vm938, %vm946
    %vm955 = vmand %vm939, %vm947
    %v956 = vsel %vm948, 1, 0
    %v957 = vsel %vm949, 1, 0
    %v958 = vsel %vm950, 1, 0
    %v959 = vsel %vm951, 1, 0
    %v960 = vsel %vm952, 1, 0
    %v961 = vsel %vm953, 1, 0
    %v962 = vsel %vm954, 1, 0
    %v963 = vsel %vm955, 1, 0
    %v964 = vcvt.s32.f32 %v956
    %v965 = vcvt.s32.f32 %v957
    %v966 = vcvt.s32.f32 %v958
    %v967 = vcvt.s32.f32 %v959
    %v968 = vcvt.s32.f32 %v960
    %v969 = vcvt.s32.f32 %v961
    %v970 = vcvt.s32.f32 %v962
    %v971 = vcvt.s32.f32 %v963
    %v972 = vld [vmem:[%s2] sm:$0x1]
    %v974 = vlaneseq
    %v975 = vshrl.u32 %v974, 7
    %v976 = vsub.s32 0, %v975
    %v977 = vrot.slane %v972, %v976
    %v979 = vmul.f32 %v964, %v977
    %v980 = vmul.f32 %v965, %v977
    %v981 = vmul.f32 %v966, %v977
    %v982 = vmul.f32 %v967, %v977
    %v983 = vmul.f32 %v968, %v977
    %v984 = vmul.f32 %v969, %v977
    %v985 = vmul.f32 %v970, %v977
    %v986 = vmul.f32 %v971, %v977
    %v987 = vadd.f32 %v915, %v979
    %v988 = vadd.f32 %v916, %v980
    %v989 = vadd.f32 %v917, %v981
    %v990 = vadd.f32 %v918, %v982
    %v991 = vadd.f32 %v919, %v983
    %v992 = vadd.f32 %v920, %v984
    %v993 = vadd.f32 %v921, %v985
    %v994 = vadd.f32 %v922, %v986
    %v995 = vmax.f32 %v987, 0.0
    %v996 = vmax.f32 %v988, 0.0
    %v997 = vmax.f32 %v989, 0.0
    %v998 = vmax.f32 %v990, 0.0
    %v999 = vmax.f32 %v991, 0.0
    %v1000 = vmax.f32 %v992, 0.0
    %v1001 = vmax.f32 %v993, 0.0
    %v1002 = vmax.f32 %v994, 0.0
    %v1003 = vpack.c.bf16 %v996, %v995
    %v1004 = vpack.c.bf16 %v998, %v997
    %v1005 = vpack.c.bf16 %v1000, %v999
    %v1006 = vpack.c.bf16 %v1002, %v1001
    %1007 = vst [vmem:[#allocation2] sm:$0xff] %v1003
    %1008 = vst [vmem:[#allocation2 + $0x8] sm:$0xff] %v1004
    %1009 = vst [vmem:[#allocation2 + $0x10] sm:$0xff] %v1005
    %1010 = vst [vmem:[#allocation2 + $0x18] sm:$0xff] %v1006
    %v1011 = vld [vmem:[#allocation2] sm:$0x3f]
    %v1012 = vld [vmem:[%s3] sm:$0xff]
    %v1013 = vld [vmem:[%s3 + $0x8] sm:$0xff]
    %v1014 = vld [vmem:[%s3 + $0x10] sm:$0xff]
    %v1015 = vld [vmem:[%s3 + $0x18] sm:$0xff]
    %v1016 = vld [vmem:[%s3 + $0x20] sm:$0xff]
    %v1017 = vld [vmem:[%s3 + $0x28] sm:$0xff]
    %v1018 = vld [vmem:[%s3 + $0x30] sm:$0xff]
    %v1019 = vld [vmem:[%s3 + $0x38] sm:$0xff]
    %v1020 = vld [vmem:[%s3 + $0x40] sm:$0xff]
    %v1021 = vld [vmem:[%s3 + $0x48] sm:$0xff]
    %v1022 = vld [vmem:[%s3 + $0x50] sm:$0xff]
    %v1023 = vld [vmem:[%s3 + $0x58] sm:$0xff]
    %v1024 = vld [vmem:[%s3 + $0x60] sm:$0xff]
    %v1025 = vld [vmem:[%s3 + $0x68] sm:$0xff]
    %v1026 = vld [vmem:[%s3 + $0x70] sm:$0xff]
    %v1027 = vld [vmem:[%s3 + $0x78] sm:$0xff]
    %v1028 = vld [vmem:[#allocation2] sm:$0xf8]
    %v1029 = vld [vmem:[#allocation2 + $0x8] sm:$0x1]
    %s1030 = scalar_lea.vmem %s3, 128
    %v1031 = vld [vmem:[%s1030] sm:$0xff]
    %v1032 = vld [vmem:[%s1030 + $0x8] sm:$0xff]
    %v1033 = vld [vmem:[%s1030 + $0x10] sm:$0xff]
    %v1034 = vld [vmem:[%s1030 + $0x18] sm:$0xff]
    %v1035 = vld [vmem:[%s1030 + $0x20] sm:$0xff]
    %v1036 = vld [vmem:[%s1030 + $0x28] sm:$0xff]
    %v1037 = vld [vmem:[%s1030 + $0x30] sm:$0xff]
    %v1038 = vld [vmem:[%s1030 + $0x38] sm:$0xff]
    %v1039 = vld [vmem:[%s1030 + $0x40] sm:$0xff]
    %v1040 = vld [vmem:[%s1030 + $0x48] sm:$0xff]
    %v1041 = vld [vmem:[%s1030 + $0x50] sm:$0xff]
    %v1042 = vld [vmem:[%s1030 + $0x58] sm:$0xff]
    %v1043 = vld [vmem:[%s1030 + $0x60] sm:$0xff]
    %v1044 = vld [vmem:[%s1030 + $0x68] sm:$0xff]
    %v1045 = vld [vmem:[%s1030 + $0x70] sm:$0xff]
    %v1046 = vld [vmem:[%s1030 + $0x78] sm:$0xff]
    %vm1049 = vcmask 1044480
    %v1050 = vrot.slane %v1028, 3
    %v1051 = vrot.slane %v1029, 3
    %v1052 = vsel %vm1049, %v1050, %v1051
    %v1070 = vunpack.c.l.b16 %v1031
    %v1071 = vunpack.c.h.b16 %v1031
    %v1072 = vunpack.c.l.b16 %v1032
    %v1073 = vunpack.c.h.b16 %v1032
    %v1074 = vunpack.c.l.b16 %v1033
    %v1075 = vunpack.c.h.b16 %v1033
    %v1076 = vunpack.c.l.b16 %v1034
    %v1077 = vunpack.c.h.b16 %v1034
    %v1078 = vunpack.c.l.b16 %v1035
    %v1079 = vunpack.c.h.b16 %v1035
    %v1080 = vunpack.c.l.b16 %v1036
    %v1081 = vunpack.c.h.b16 %v1036
    %v1082 = vunpack.c.l.b16 %v1037
    %v1083 = vunpack.c.h.b16 %v1037
    %v1084 = vunpack.c.l.b16 %v1038
    %v1085 = vunpack.c.h.b16 %v1038
    %v1086 = vunpack.c.l.b16 %v1039
    %v1087 = vunpack.c.h.b16 %v1039
    %v1088 = vunpack.c.l.b16 %v1040
    %v1089 = vunpack.c.h.b16 %v1040
    %v1090 = vunpack.c.l.b16 %v1041
    %v1091 = vunpack.c.h.b16 %v1041
    %v1092 = vunpack.c.l.b16 %v1042
    %v1093 = vunpack.c.h.b16 %v1042
    %v1094 = vunpack.c.l.b16 %v1043
    %v1095 = vunpack.c.h.b16 %v1043
    %v1096 = vunpack.c.l.b16 %v1044
    %v1097 = vunpack.c.h.b16 %v1044
    %v1098 = vunpack.c.l.b16 %v1045
    %v1099 = vunpack.c.h.b16 %v1045
    %v1100 = vunpack.c.l.b16 %v1046
    %v1101 = vunpack.c.h.b16 %v1046
    %v1102 = vpack.c.b16 %v1072, %v1070
    %v1103 = vpack.c.b16 %v1073, %v1071
    %v1104 = vpack.c.b16 %v1076, %v1074
    %v1105 = vpack.c.b16 %v1077, %v1075
    %v1106 = vpack.c.b16 %v1080, %v1078
    %v1107 = vpack.c.b16 %v1081, %v1079
    %v1108 = vpack.c.b16 %v1084, %v1082
    %v1109 = vpack.c.b16 %v1085, %v1083
    %v1110 = vpack.c.b16 %v1088, %v1086
    %v1111 = vpack.c.b16 %v1089, %v1087
    %v1112 = vpack.c.b16 %v1092, %v1090
    %v1113 = vpack.c.b16 %v1093, %v1091
    %v1114 = vpack.c.b16 %v1096, %v1094
    %v1115 = vpack.c.b16 %v1097, %v1095
    %v1116 = vpack.c.b16 %v1100, %v1098
    %v1117 = vpack.c.b16 %v1101, %v1099
    %1134 = vmatprep.subr.bf16.mxu0 %v1103
    %1135 = vmatpush1.bf16.msra.mxu0 %v1102
    %1136 = vmatprep.subr.bf16.mxu0 %v1105
    %1137 = vmatpush1.bf16.msra.mxu0 %v1104
    %1138 = vmatprep.subr.bf16.mxu0 %v1107
    %1139 = vmatpush1.bf16.msra.mxu0 %v1106
    %1140 = vmatprep.subr.bf16.mxu0 %v1109
    %1141 = vmatpush1.bf16.msra.mxu0 %v1108
    %1142 = vmatprep.subr.bf16.mxu0 %v1111
    %1143 = vmatpush1.bf16.msra.mxu0 %v1110
    %1144 = vmatprep.subr.bf16.mxu0 %v1113
    %1145 = vmatpush1.bf16.msra.mxu0 %v1112
    %1146 = vmatprep.subr.bf16.mxu0 %v1115
    %1147 = vmatpush1.bf16.msra.mxu0 %v1114
    %1148 = vmatprep.subr.bf16.mxu0 %v1117
    %1149 = vmatpush1.bf16.msra.mxu0 %v1116
    %1150 = vmatprep.subr.bf16.mxu0 0
    %1151 = vmatpush1.bf16.msra.mxu0 0
    %1152 = vmatprep.subr.bf16.mxu0 0
    %1153 = vmatpush1.bf16.msra.mxu0 0
    %1154 = vmatprep.subr.bf16.mxu0 0
    %1155 = vmatpush1.bf16.msra.mxu0 0
    %1156 = vmatprep.subr.bf16.mxu0 0
    %1157 = vmatpush1.bf16.msra.mxu0 0
    %1158 = vmatprep.subr.bf16.mxu0 0
    %1159 = vmatpush1.bf16.msra.mxu0 0
    %1160 = vmatprep.subr.bf16.mxu0 0
    %1161 = vmatpush1.bf16.msra.mxu0 0
    %1162 = vmatprep.subr.bf16.mxu0 0
    %1163 = vmatpush1.bf16.msra.mxu0 0
    %1164 = vmatprep.subr.bf16.mxu0 0
    %1165 = vmatpush1.bf16.msra.mxu0 0
    %1166 = vmatprep.mubr.bf16.mxu0 0
    %1167 = vmatmul.mubr.bf16.gmra.mrb[0].mxu0 %v1052
    %v1168 = vpop.f32.mrb[0].mxu0
    %v1169 = vadd.f32 0.0, %v1168
    %v1170 = vpop.f32.mrb[0].mxu0
    %v1171 = vadd.f32 0.0, %v1170
    %v1172 = vpop.f32.mrb[0].mxu0
    %v1173 = vadd.f32 0.0, %v1172
    %v1174 = vpop.f32.mrb[0].mxu0
    %v1175 = vadd.f32 0.0, %v1174
    %1176 = vdwg.mxu0
    %v1193 = vunpack.c.l.b16 %v1012
    %v1194 = vunpack.c.h.b16 %v1012
    %v1195 = vunpack.c.l.b16 %v1013
    %v1196 = vunpack.c.h.b16 %v1013
    %v1197 = vunpack.c.l.b16 %v1014
    %v1198 = vunpack.c.h.b16 %v1014
    %v1199 = vunpack.c.l.b16 %v1015
    %v1200 = vunpack.c.h.b16 %v1015
    %v1201 = vunpack.c.l.b16 %v1016
    %v1202 = vunpack.c.h.b16 %v1016
    %v1203 = vunpack.c.l.b16 %v1017
    %v1204 = vunpack.c.h.b16 %v1017
    %v1205 = vunpack.c.l.b16 %v1018
    %v1206 = vunpack.c.h.b16 %v1018
    %v1207 = vunpack.c.l.b16 %v1019
    %v1208 = vunpack.c.h.b16 %v1019
    %v1209 = vunpack.c.l.b16 %v1020
    %v1210 = vunpack.c.h.b16 %v1020
    %v1211 = vunpack.c.l.b16 %v1021
    %v1212 = vunpack.c.h.b16 %v1021
    %v1213 = vunpack.c.l.b16 %v1022
    %v1214 = vunpack.c.h.b16 %v1022
    %v1215 = vunpack.c.l.b16 %v1023
    %v1216 = vunpack.c.h.b16 %v1023
    %v1217 = vunpack.c.l.b16 %v1024
    %v1218 = vunpack.c.h.b16 %v1024
    %v1219 = vunpack.c.l.b16 %v1025
    %v1220 = vunpack.c.h.b16 %v1025
    %v1221 = vunpack.c.l.b16 %v1026
    %v1222 = vunpack.c.h.b16 %v1026
    %v1223 = vunpack.c.l.b16 %v1027
    %v1224 = vunpack.c.h.b16 %v1027
    %v1225 = vpack.c.b16 %v1195, %v1193
    %v1226 = vpack.c.b16 %v1196, %v1194
    %v1227 = vpack.c.b16 %v1199, %v1197
    %v1228 = vpack.c.b16 %v1200, %v1198
    %v1229 = vpack.c.b16 %v1203, %v1201
    %v1230 = vpack.c.b16 %v1204, %v1202
    %v1231 = vpack.c.b16 %v1207, %v1205
    %v1232 = vpack.c.b16 %v1208, %v1206
    %v1233 = vpack.c.b16 %v1211, %v1209
    %v1234 = vpack.c.b16 %v1212, %v1210
    %v1235 = vpack.c.b16 %v1215, %v1213
    %v1236 = vpack.c.b16 %v1216, %v1214
    %v1237 = vpack.c.b16 %v1219, %v1217
    %v1238 = vpack.c.b16 %v1220, %v1218
    %v1239 = vpack.c.b16 %v1223, %v1221
    %v1240 = vpack.c.b16 %v1224, %v1222
    %1257 = vmatprep.subr.bf16.mxu0 %v1226
    %1258 = vmatpush1.bf16.msra.mxu0 %v1225
    %1259 = vmatprep.subr.bf16.mxu0 %v1228
    %1260 = vmatpush1.bf16.msra.mxu0 %v1227
    %1261 = vmatprep.subr.bf16.mxu0 %v1230
    %1262 = vmatpush1.bf16.msra.mxu0 %v1229
    %1263 = vmatprep.subr.bf16.mxu0 %v1232
    %1264 = vmatpush1.bf16.msra.mxu0 %v1231
    %1265 = vmatprep.subr.bf16.mxu0 %v1234
    %1266 = vmatpush1.bf16.msra.mxu0 %v1233
    %1267 = vmatprep.subr.bf16.mxu0 %v1236
    %1268 = vmatpush1.bf16.msra.mxu0 %v1235
    %1269 = vmatprep.subr.bf16.mxu0 %v1238
    %1270 = vmatpush1.bf16.msra.mxu0 %v1237
    %1271 = vmatprep.subr.bf16.mxu0 %v1240
    %1272 = vmatpush1.bf16.msra.mxu0 %v1239
    %1273 = vmatprep.subr.bf16.mxu0 0
    %1274 = vmatpush1.bf16.msra.mxu0 0
    %1275 = vmatprep.subr.bf16.mxu0 0
    %1276 = vmatpush1.bf16.msra.mxu0 0
    %1277 = vmatprep.subr.bf16.mxu0 0
    %1278 = vmatpush1.bf16.msra.mxu0 0
    %1279 = vmatprep.subr.bf16.mxu0 0
    %1280 = vmatpush1.bf16.msra.mxu0 0
    %1281 = vmatprep.subr.bf16.mxu0 0
    %1282 = vmatpush1.bf16.msra.mxu0 0
    %1283 = vmatprep.subr.bf16.mxu0 0
    %1284 = vmatpush1.bf16.msra.mxu0 0
    %1285 = vmatprep.subr.bf16.mxu0 0
    %1286 = vmatpush1.bf16.msra.mxu0 0
    %1287 = vmatprep.subr.bf16.mxu0 0
    %1288 = vmatpush1.bf16.msra.mxu0 0
    %1289 = vmatprep.mubr.bf16.mxu0 0
    %1290 = vmatmul.mubr.bf16.gmra.mrb[0].mxu0 %v1011
    %v1291 = vpop.f32.mrb[0].mxu0
    %v1292 = vadd.f32 %v1169, %v1291
    %v1293 = vpop.f32.mrb[0].mxu0
    %v1294 = vadd.f32 %v1171, %v1293
    %v1295 = vpop.f32.mrb[0].mxu0
    %v1296 = vadd.f32 %v1173, %v1295
    %v1297 = vpop.f32.mrb[0].mxu0
    %v1298 = vadd.f32 %v1175, %v1297
    %1299 = vdwg.mxu0
    %v1300 = vld [vmem:[#allocation2] sm:$0xc0]
    %v1301 = vld [vmem:[#allocation2 + $0x8] sm:$0xf]
    %s1302 = scalar_lea.vmem %s3, 256
    %v1303 = vld [vmem:[%s1302] sm:$0xff]
    %v1304 = vld [vmem:[%s1302 + $0x8] sm:$0xff]
    %v1305 = vld [vmem:[%s1302 + $0x10] sm:$0xff]
    %v1306 = vld [vmem:[%s1302 + $0x18] sm:$0xff]
    %v1307 = vld [vmem:[%s1302 + $0x20] sm:$0xff]
    %v1308 = vld [vmem:[%s1302 + $0x28] sm:$0xff]
    %v1309 = vld [vmem:[%s1302 + $0x30] sm:$0xff]
    %v1310 = vld [vmem:[%s1302 + $0x38] sm:$0xff]
    %v1311 = vld [vmem:[%s1302 + $0x40] sm:$0xff]
    %v1312 = vld [vmem:[%s1302 + $0x48] sm:$0xff]
    %v1313 = vld [vmem:[%s1302 + $0x50] sm:$0xff]
    %v1314 = vld [vmem:[%s1302 + $0x58] sm:$0xff]
    %v1315 = vld [vmem:[%s1302 + $0x60] sm:$0xff]
    %v1316 = vld [vmem:[%s1302 + $0x68] sm:$0xff]
    %v1317 = vld [vmem:[%s1302 + $0x70] sm:$0xff]
    %v1318 = vld [vmem:[%s1302 + $0x78] sm:$0xff]
    %vm1321 = vcmask 1041408
    %v1322 = vrot.slane %v1300, 6
    %v1323 = vrot.slane %v1301, 6
    %v1324 = vsel %vm1321, %v1322, %v1323
    %v1342 = vunpack.c.l.b16 %v1303
    %v1343 = vunpack.c.h.b16 %v1303
    %v1344 = vunpack.c.l.b16 %v1304
    %v1345 = vunpack.c.h.b16 %v1304
    %v1346 = vunpack.c.l.b16 %v1305
    %v1347 = vunpack.c.h.b16 %v1305
    %v1348 = vunpack.c.l.b16 %v1306
    %v1349 = vunpack.c.h.b16 %v1306
    %v1350 = vunpack.c.l.b16 %v1307
    %v1351 = vunpack.c.h.b16 %v1307
    %v1352 = vunpack.c.l.b16 %v1308
    %v1353 = vunpack.c.h.b16 %v1308
    %v1354 = vunpack.c.l.b16 %v1309
    %v1355 = vunpack.c.h.b16 %v1309
    %v1356 = vunpack.c.l.b16 %v1310
    %v1357 = vunpack.c.h.b16 %v1310
    %v1358 = vunpack.c.l.b16 %v1311
    %v1359 = vunpack.c.h.b16 %v1311
    %v1360 = vunpack.c.l.b16 %v1312
    %v1361 = vunpack.c.h.b16 %v1312
    %v1362 = vunpack.c.l.b16 %v1313
    %v1363 = vunpack.c.h.b16 %v1313
    %v1364 = vunpack.c.l.b16 %v1314
    %v1365 = vunpack.c.h.b16 %v1314
    %v1366 = vunpack.c.l.b16 %v1315
    %v1367 = vunpack.c.h.b16 %v1315
    %v1368 = vunpack.c.l.b16 %v1316
    %v1369 = vunpack.c.h.b16 %v1316
    %v1370 = vunpack.c.l.b16 %v1317
    %v1371 = vunpack.c.h.b16 %v1317
    %v1372 = vunpack.c.l.b16 %v1318
    %v1373 = vunpack.c.h.b16 %v1318
    %v1374 = vpack.c.b16 %v1344, %v1342
    %v1375 = vpack.c.b16 %v1345, %v1343
    %v1376 = vpack.c.b16 %v1348, %v1346
    %v1377 = vpack.c.b16 %v1349, %v1347
    %v1378 = vpack.c.b16 %v1352, %v1350
    %v1379 = vpack.c.b16 %v1353, %v1351
    %v1380 = vpack.c.b16 %v1356, %v1354
    %v1381 = vpack.c.b16 %v1357, %v1355
    %v1382 = vpack.c.b16 %v1360, %v1358
    %v1383 = vpack.c.b16 %v1361, %v1359
    %v1384 = vpack.c.b16 %v1364, %v1362
    %v1385 = vpack.c.b16 %v1365, %v1363
    %v1386 = vpack.c.b16 %v1368, %v1366
    %v1387 = vpack.c.b16 %v1369, %v1367
    %v1388 = vpack.c.b16 %v1372, %v1370
    %v1389 = vpack.c.b16 %v1373, %v1371
    %1406 = vmatprep.subr.bf16.mxu0 %v1375
    %1407 = vmatpush1.bf16.msra.mxu0 %v1374
    %1408 = vmatprep.subr.bf16.mxu0 %v1377
    %1409 = vmatpush1.bf16.msra.mxu0 %v1376
    %1410 = vmatprep.subr.bf16.mxu0 %v1379
    %1411 = vmatpush1.bf16.msra.mxu0 %v1378
    %1412 = vmatprep.subr.bf16.mxu0 %v1381
    %1413 = vmatpush1.bf16.msra.mxu0 %v1380
    %1414 = vmatprep.subr.bf16.mxu0 %v1383
    %1415 = vmatpush1.bf16.msra.mxu0 %v1382
    %1416 = vmatprep.subr.bf16.mxu0 %v1385
    %1417 = vmatpush1.bf16.msra.mxu0 %v1384
    %1418 = vmatprep.subr.bf16.mxu0 %v1387
    %1419 = vmatpush1.bf16.msra.mxu0 %v1386
    %1420 = vmatprep.subr.bf16.mxu0 %v1389
    %1421 = vmatpush1.bf16.msra.mxu0 %v1388
    %1422 = vmatprep.subr.bf16.mxu0 0
    %1423 = vmatpush1.bf16.msra.mxu0 0
    %1424 = vmatprep.subr.bf16.mxu0 0
    %1425 = vmatpush1.bf16.msra.mxu0 0
    %1426 = vmatprep.subr.bf16.mxu0 0
    %1427 = vmatpush1.bf16.msra.mxu0 0
    %1428 = vmatprep.subr.bf16.mxu0 0
    %1429 = vmatpush1.bf16.msra.mxu0 0
    %1430 = vmatprep.subr.bf16.mxu0 0
    %1431 = vmatpush1.bf16.msra.mxu0 0
    %1432 = vmatprep.subr.bf16.mxu0 0
    %1433 = vmatpush1.bf16.msra.mxu0 0
    %1434 = vmatprep.subr.bf16.mxu0 0
    %1435 = vmatpush1.bf16.msra.mxu0 0
    %1436 = vmatprep.subr.bf16.mxu0 0
    %1437 = vmatpush1.bf16.msra.mxu0 0
    %1438 = vmatprep.mubr.bf16.mxu0 0
    %1439 = vmatmul.mubr.bf16.gmra.mrb[0].mxu0 %v1324
    %v1440 = vpop.f32.mrb[0].mxu0
    %v1441 = vadd.f32 0.0, %v1440
    %v1442 = vpop.f32.mrb[0].mxu0
    %v1443 = vadd.f32 0.0, %v1442
    %v1444 = vpop.f32.mrb[0].mxu0
    %v1445 = vadd.f32 0.0, %v1444
    %v1446 = vpop.f32.mrb[0].mxu0
    %v1447 = vadd.f32 0.0, %v1446
    %1448 = vdwg.mxu0
    %v1449 = vadd.f32 %v1292, %v1441
    %v1450 = vadd.f32 %v1294, %v1443
    %v1451 = vadd.f32 %v1296, %v1445
    %v1452 = vadd.f32 %v1298, %v1447
    %vm1457 = vcmask 1041408
    %v1458 = vrot.slane %v1449, 6
    %v1459 = vrot.slane %v1451, 6
    %v1460 = vsel %vm1457, %v1458, %v1459
    %v1461 = vrot.slane %v1450, 6
    %v1462 = vrot.slane %v1452, 6
    %v1463 = vsel %vm1457, %v1461, %v1462
    %v1466 = vmax.f32 %v1449, %v1460
    %v1467 = vmax.f32 %v1450, %v1463
    %v1468 = vmax.f32 %v1466, %v1467
    %v1469 = vld [vmem:[%s4] sm:$0x1]
    %v1471 = vlaneseq
    %v1472 = vshrl.u32 %v1471, 7
    %v1473 = vsub.s32 0, %v1472
    %v1474 = vrot.slane %v1469, %v1473
    %v1476 = vadd.f32 %v1468, %v1474
    %v1477 = vmax.f32 %v1476, 0.0
    %v1478 = vpack.c.bf16 %v1477, %v1477
    %v1479 = vld [vmem:[%s5] sm:$0xf]
    %v1480 = vld [vmem:[%s5 + $0x4] sm:$0xf]
    %v1481 = vld [vmem:[%s5 + $0x8] sm:$0xf]
    %v1482 = vld [vmem:[%s5 + $0xc] sm:$0xf]
    %v1483 = vld [vmem:[%s5 + $0x10] sm:$0xf]
    %v1484 = vld [vmem:[%s5 + $0x14] sm:$0xf]
    %v1485 = vld [vmem:[%s5 + $0x18] sm:$0xf]
    %v1486 = vld [vmem:[%s5 + $0x1c] sm:$0xf]
    %v1487 = vld [vmem:[%s5 + $0x20] sm:$0xf]
    %v1488 = vld [vmem:[%s5 + $0x24] sm:$0xf]
    %v1489 = vld [vmem:[%s5 + $0x28] sm:$0xf]
    %v1490 = vld [vmem:[%s5 + $0x2c] sm:$0xf]
    %v1491 = vld [vmem:[%s5 + $0x30] sm:$0xf]
    %v1492 = vld [vmem:[%s5 + $0x34] sm:$0xf]
    %v1493 = vld [vmem:[%s5 + $0x38] sm:$0xf]
    %v1494 = vld [vmem:[%s5 + $0x3c] sm:$0xf]
    %v1495 = vld [vmem:[#allocation2 + $0x8] sm:$0x7e]
    %v1497 = vrot.slane %v1495, 1
    %1499 = vmatprep.subr.bf16.mxu0 %v1103
    %1500 = vmatpush1.bf16.msra.mxu0 %v1102
    %1501 = vmatprep.subr.bf16.mxu0 %v1105
    %1502 = vmatpush1.bf16.msra.mxu0 %v1104
    %1503 = vmatprep.subr.bf16.mxu0 %v1107
    %1504 = vmatpush1.bf16.msra.mxu0 %v1106
    %1505 = vmatprep.subr.bf16.mxu0 %v1109
    %1506 = vmatpush1.bf16.msra.mxu0 %v1108
    %1507 = vmatprep.subr.bf16.mxu0 %v1111
    %1508 = vmatpush1.bf16.msra.mxu0 %v1110
    %1509 = vmatprep.subr.bf16.mxu0 %v1113
    %1510 = vmatpush1.bf16.msra.mxu0 %v1112
    %1511 = vmatprep.subr.bf16.mxu0 %v1115
    %1512 = vmatpush1.bf16.msra.mxu0 %v1114
    %1513 = vmatprep.subr.bf16.mxu0 %v1117
    %1514 = vmatpush1.bf16.msra.mxu0 %v1116
    %1515 = vmatprep.subr.bf16.mxu0 0
    %1516 = vmatpush1.bf16.msra.mxu0 0
    %1517 = vmatprep.subr.bf16.mxu0 0
    %1518 = vmatpush1.bf16.msra.mxu0 0
    %1519 = vmatprep.subr.bf16.mxu0 0
    %1520 = vmatpush1.bf16.msra.mxu0 0
    %1521 = vmatprep.subr.bf16.mxu0 0
    %1522 = vmatpush1.bf16.msra.mxu0 0
    %1523 = vmatprep.subr.bf16.mxu0 0
    %1524 = vmatpush1.bf16.msra.mxu0 0
    %1525 = vmatprep.subr.bf16.mxu0 0
    %1526 = vmatpush1.bf16.msra.mxu0 0
    %1527 = vmatprep.subr.bf16.mxu0 0
    %1528 = vmatpush1.bf16.msra.mxu0 0
    %1529 = vmatprep.subr.bf16.mxu0 0
    %1530 = vmatpush1.bf16.msra.mxu0 0
    %1531 = vmatprep.mubr.bf16.mxu0 0
    %1532 = vmatmul.mubr.bf16.gmra.mrb[0].mxu0 %v1497
    %v1533 = vpop.f32.mrb[0].mxu0
    %v1534 = vadd.f32 0.0, %v1533
    %v1535 = vpop.f32.mrb[0].mxu0
    %v1536 = vadd.f32 0.0, %v1535
    %v1537 = vpop.f32.mrb[0].mxu0
    %v1538 = vadd.f32 0.0, %v1537
    %v1539 = vpop.f32.mrb[0].mxu0
    %v1540 = vadd.f32 0.0, %v1539
    %1541 = vdwg.mxu0
    %1542 = vmatprep.subr.bf16.mxu0 %v1226
    %1543 = vmatpush1.bf16.msra.mxu0 %v1225
    %1544 = vmatprep.subr.bf16.mxu0 %v1228
    %1545 = vmatpush1.bf16.msra.mxu0 %v1227
    %1546 = vmatprep.subr.bf16.mxu0 %v1230
    %1547 = vmatpush1.bf16.msra.mxu0 %v1229
    %1548 = vmatprep.subr.bf16.mxu0 %v1232
    %1549 = vmatpush1.bf16.msra.mxu0 %v1231
    %1550 = vmatprep.subr.bf16.mxu0 %v1234
    %1551 = vmatpush1.bf16.msra.mxu0 %v1233
    %1552 = vmatprep.subr.bf16.mxu0 %v1236
    %1553 = vmatpush1.bf16.msra.mxu0 %v1235
    %1554 = vmatprep.subr.bf16.mxu0 %v1238
    %1555 = vmatpush1.bf16.msra.mxu0 %v1237
    %1556 = vmatprep.subr.bf16.mxu0 %v1240
    %1557 = vmatpush1.bf16.msra.mxu0 %v1239
    %1558 = vmatprep.subr.bf16.mxu0 0
    %1559 = vmatpush1.bf16.msra.mxu0 0
    %1560 = vmatprep.subr.bf16.mxu0 0
    %1561 = vmatpush1.bf16.msra.mxu0 0
    %1562 = vmatprep.subr.bf16.mxu0 0
    %1563 = vmatpush1.bf16.msra.mxu0 0
    %1564 = vmatprep.subr.bf16.mxu0 0
    %1565 = vmatpush1.bf16.msra.mxu0 0
    %1566 = vmatprep.subr.bf16.mxu0 0
    %1567 = vmatpush1.bf16.msra.mxu0 0
    %1568 = vmatprep.subr.bf16.mxu0 0
    %1569 = vmatpush1.bf16.msra.mxu0 0
    %1570 = vmatprep.subr.bf16.mxu0 0
    %1571 = vmatpush1.bf16.msra.mxu0 0
    %1572 = vmatprep.subr.bf16.mxu0 0
    %1573 = vmatpush1.bf16.msra.mxu0 0
    %1574 = vmatprep.mubr.bf16.mxu0 0
    %1575 = vmatmul.mubr.bf16.gmra.mrb[0].mxu0 %v1324
    %v1576 = vpop.f32.mrb[0].mxu0
    %v1577 = vadd.f32 %v1534, %v1576
    %v1578 = vpop.f32.mrb[0].mxu0
    %v1579 = vadd.f32 %v1536, %v1578
    %v1580 = vpop.f32.mrb[0].mxu0
    %v1581 = vadd.f32 %v1538, %v1580
    %v1582 = vpop.f32.mrb[0].mxu0
    %v1583 = vadd.f32 %v1540, %v1582
    %1584 = vdwg.mxu0
    %v1585 = vld [vmem:[#allocation2 + $0x8] sm:$0xf0]
    %v1586 = vld [vmem:[#allocation2 + $0x10] sm:$0x3]
    %vm1589 = vcmask 1043456
    %v1590 = vrot.slane %v1585, 4
    %v1591 = vrot.slane %v1586, 4
    %v1592 = vsel %vm1589, %v1590, %v1591
    %1594 = vmatprep.subr.bf16.mxu0 %v1375
    %1595 = vmatpush1.bf16.msra.mxu0 %v1374
    %1596 = vmatprep.subr.bf16.mxu0 %v1377
    %1597 = vmatpush1.bf16.msra.mxu0 %v1376
    %1598 = vmatprep.subr.bf16.mxu0 %v1379
    %1599 = vmatpush1.bf16.msra.mxu0 %v1378
    %1600 = vmatprep.subr.bf16.mxu0 %v1381
    %1601 = vmatpush1.bf16.msra.mxu0 %v1380
    %1602 = vmatprep.subr.bf16.mxu0 %v1383
    %1603 = vmatpush1.bf16.msra.mxu0 %v1382
    %1604 = vmatprep.subr.bf16.mxu0 %v1385
    %1605 = vmatpush1.bf16.msra.mxu0 %v1384
    %1606 = vmatprep.subr.bf16.mxu0 %v1387
    %1607 = vmatpush1.bf16.msra.mxu0 %v1386
    %1608 = vmatprep.subr.bf16.mxu0 %v1389
    %1609 = vmatpush1.bf16.msra.mxu0 %v1388
    %1610 = vmatprep.subr.bf16.mxu0 0
    %1611 = vmatpush1.bf16.msra.mxu0 0
    %1612 = vmatprep.subr.bf16.mxu0 0
    %1613 = vmatpush1.bf16.msra.mxu0 0
    %1614 = vmatprep.subr.bf16.mxu0 0
    %1615 = vmatpush1.bf16.msra.mxu0 0
    %1616 = vmatprep.subr.bf16.mxu0 0
    %1617 = vmatpush1.bf16.msra.mxu0 0
    %1618 = vmatprep.subr.bf16.mxu0 0
    %1619 = vmatpush1.bf16.msra.mxu0 0
    %1620 = vmatprep.subr.bf16.mxu0 0
    %1621 = vmatpush1.bf16.msra.mxu0 0
    %1622 = vmatprep.subr.bf16.mxu0 0
    %1623 = vmatpush1.bf16.msra.mxu0 0
    %1624 = vmatprep.subr.bf16.mxu0 0
    %1625 = vmatpush1.bf16.msra.mxu0 0
    %1626 = vmatprep.mubr.bf16.mxu0 0
    %1627 = vmatmul.mubr.bf16.gmra.mrb[0].mxu0 %v1592
    %v1628 = vpop.f32.mrb[0].mxu0
    %v1629 = vadd.f32 0.0, %v1628
    %v1630 = vpop.f32.mrb[0].mxu0
    %v1631 = vadd.f32 0.0, %v1630
    %v1632 = vpop.f32.mrb[0].mxu0
    %v1633 = vadd.f32 0.0, %v1632
    %v1634 = vpop.f32.mrb[0].mxu0
    %v1635 = vadd.f32 0.0, %v1634
    %1636 = vdwg.mxu0
    %v1637 = vadd.f32 %v1577, %v1629
    %v1638 = vadd.f32 %v1579, %v1631
    %v1639 = vadd.f32 %v1581, %v1633
    %v1640 = vadd.f32 %v1583, %v1635
    %v1645 = vrot.slane %v1637, 6
    %v1646 = vrot.slane %v1639, 6
    %v1647 = vsel %vm1457, %v1645, %v1646
    %v1648 = vrot.slane %v1638, 6
    %v1649 = vrot.slane %v1640, 6
    %v1650 = vsel %vm1457, %v1648, %v1649
    %v1653 = vmax.f32 %v1637, %v1647
    %v1654 = vmax.f32 %v1638, %v1650
    %v1655 = vmax.f32 %v1653, %v1654
    %v1656 = vadd.f32 %v1655, %v1474
    %v1657 = vmax.f32 %v1656, 0.0
    %v1658 = vpack.c.bf16 %v1657, %v1657
    %s1659 = scalar_lea.vmem %s5, 64
    %v1660 = vld [vmem:[%s1659] sm:$0xf]
    %v1661 = vld [vmem:[%s1659 + $0x4] sm:$0xf]
    %v1662 = vld [vmem:[%s1659 + $0x8] sm:$0xf]
    %v1663 = vld [vmem:[%s1659 + $0xc] sm:$0xf]
    %v1664 = vld [vmem:[%s1659 + $0x10] sm:$0xf]
    %v1665 = vld [vmem:[%s1659 + $0x14] sm:$0xf]
    %v1666 = vld [vmem:[%s1659 + $0x18] sm:$0xf]
    %v1667 = vld [vmem:[%s1659 + $0x1c] sm:$0xf]
    %v1668 = vld [vmem:[%s1659 + $0x20] sm:$0xf]
    %v1669 = vld [vmem:[%s1659 + $0x24] sm:$0xf]
    %v1670 = vld [vmem:[%s1659 + $0x28] sm:$0xf]
    %v1671 = vld [vmem:[%s1659 + $0x2c] sm:$0xf]
    %v1672 = vld [vmem:[%s1659 + $0x30] sm:$0xf]
    %v1673 = vld [vmem:[%s1659 + $0x34] sm:$0xf]
    %v1674 = vld [vmem:[%s1659 + $0x38] sm:$0xf]
    %v1675 = vld [vmem:[%s1659 + $0x3c] sm:$0xf]
    %v1692 = vunpack.c.l.b16 %v1660
    %v1693 = vunpack.c.l.b16 %v1661
    %v1694 = vunpack.c.l.b16 %v1662
    %v1695 = vunpack.c.l.b16 %v1663
    %v1696 = vunpack.c.l.b16 %v1664
    %v1697 = vunpack.c.l.b16 %v1665
    %v1698 = vunpack.c.l.b16 %v1666
    %v1699 = vunpack.c.l.b16 %v1667
    %v1700 = vunpack.c.l.b16 %v1668
    %v1701 = vunpack.c.l.b16 %v1669
    %v1702 = vunpack.c.l.b16 %v1670
    %v1703 = vunpack.c.l.b16 %v1671
    %v1704 = vunpack.c.l.b16 %v1672
    %v1705 = vunpack.c.l.b16 %v1673
    %v1706 = vunpack.c.l.b16 %v1674
    %v1707 = vunpack.c.l.b16 %v1675
    %v1708 = vpack.c.b16 %v1693, %v1692
    %v1709 = vpack.c.b16 %v1695, %v1694
    %v1710 = vpack.c.b16 %v1697, %v1696
    %v1711 = vpack.c.b16 %v1699, %v1698
    %v1712 = vpack.c.b16 %v1701, %v1700
    %v1713 = vpack.c.b16 %v1703, %v1702
    %v1714 = vpack.c.b16 %v1705, %v1704
    %v1715 = vpack.c.b16 %v1707, %v1706
    %1724 = vmatprep.subr.bf16.mxu0 0
    %1725 = vmatpush1.bf16.msra.mxu0 %v1708
    %1726 = vmatprep.subr.bf16.mxu0 0
    %1727 = vmatpush1.bf16.msra.mxu0 %v1709
    %1728 = vmatprep.subr.bf16.mxu0 0
    %1729 = vmatpush1.bf16.msra.mxu0 %v1710
    %1730 = vmatprep.subr.bf16.mxu0 0
    %1731 = vmatpush1.bf16.msra.mxu0 %v1711
    %1732 = vmatprep.subr.bf16.mxu0 0
    %1733 = vmatpush1.bf16.msra.mxu0 %v1712
    %1734 = vmatprep.subr.bf16.mxu0 0
    %1735 = vmatpush1.bf16.msra.mxu0 %v1713
    %1736 = vmatprep.subr.bf16.mxu0 0
    %1737 = vmatpush1.bf16.msra.mxu0 %v1714
    %1738 = vmatprep.subr.bf16.mxu0 0
    %1739 = vmatpush1.bf16.msra.mxu0 %v1715
    %1740 = vmatprep.subr.bf16.mxu0 0
    %1741 = vmatpush1.bf16.msra.mxu0 0
    %1742 = vmatprep.subr.bf16.mxu0 0
    %1743 = vmatpush1.bf16.msra.mxu0 0
    %1744 = vmatprep.subr.bf16.mxu0 0
    %1745 = vmatpush1.bf16.msra.mxu0 0
    %1746 = vmatprep.subr.bf16.mxu0 0
    %1747 = vmatpush1.bf16.msra.mxu0 0
    %1748 = vmatprep.subr.bf16.mxu0 0
    %1749 = vmatpush1.bf16.msra.mxu0 0
    %1750 = vmatprep.subr.bf16.mxu0 0
    %1751 = vmatpush1.bf16.msra.mxu0 0
    %1752 = vmatprep.subr.bf16.mxu0 0
    %1753 = vmatpush1.bf16.msra.mxu0 0
    %1754 = vmatprep.subr.bf16.mxu0 0
    %1755 = vmatpush1.bf16.msra.mxu0 0
    %1756 = vmatprep.mubr.bf16.mxu0 0
    %1757 = vmatmul.mubr.bf16.gmra.mrb[0].mxu0 %v1658
    %v1758 = vpop.f32.mrb[0].mxu0
    %v1759 = vadd.f32 0.0, %v1758
    %v1760 = vpop.f32.mrb[0].mxu0
    %v1761 = vpop.f32.mrb[0].mxu0
    %v1762 = vpop.f32.mrb[0].mxu0
    %1763 = vdwg.mxu0
    %v1780 = vunpack.c.l.b16 %v1479
    %v1781 = vunpack.c.l.b16 %v1480
    %v1782 = vunpack.c.l.b16 %v1481
    %v1783 = vunpack.c.l.b16 %v1482
    %v1784 = vunpack.c.l.b16 %v1483
    %v1785 = vunpack.c.l.b16 %v1484
    %v1786 = vunpack.c.l.b16 %v1485
    %v1787 = vunpack.c.l.b16 %v1486
    %v1788 = vunpack.c.l.b16 %v1487
    %v1789 = vunpack.c.l.b16 %v1488
    %v1790 = vunpack.c.l.b16 %v1489
    %v1791 = vunpack.c.l.b16 %v1490
    %v1792 = vunpack.c.l.b16 %v1491
    %v1793 = vunpack.c.l.b16 %v1492
    %v1794 = vunpack.c.l.b16 %v1493
    %v1795 = vunpack.c.l.b16 %v1494
    %v1796 = vpack.c.b16 %v1781, %v1780
    %v1797 = vpack.c.b16 %v1783, %v1782
    %v1798 = vpack.c.b16 %v1785, %v1784
    %v1799 = vpack.c.b16 %v1787, %v1786
    %v1800 = vpack.c.b16 %v1789, %v1788
    %v1801 = vpack.c.b16 %v1791, %v1790
    %v1802 = vpack.c.b16 %v1793, %v1792
    %v1803 = vpack.c.b16 %v1795, %v1794
    %1812 = vmatprep.subr.bf16.mxu0 0
    %1813 = vmatpush1.bf16.msra.mxu0 %v1796
    %1814 = vmatprep.subr.bf16.mxu0 0
    %1815 = vmatpush1.bf16.msra.mxu0 %v1797
    %1816 = vmatprep.subr.bf16.mxu0 0
    %1817 = vmatpush1.bf16.msra.mxu0 %v1798
    %1818 = vmatprep.subr.bf16.mxu0 0
    %1819 = vmatpush1.bf16.msra.mxu0 %v1799
    %1820 = vmatprep.subr.bf16.mxu0 0
    %1821 = vmatpush1.bf16.msra.mxu0 %v1800
    %1822 = vmatprep.subr.bf16.mxu0 0
    %1823 = vmatpush1.bf16.msra.mxu0 %v1801
    %1824 = vmatprep.subr.bf16.mxu0 0
    %1825 = vmatpush1.bf16.msra.mxu0 %v1802
    %1826 = vmatprep.subr.bf16.mxu0 0
    %1827 = vmatpush1.bf16.msra.mxu0 %v1803
    %1828 = vmatprep.subr.bf16.mxu0 0
    %1829 = vmatpush1.bf16.msra.mxu0 0
    %1830 = vmatprep.subr.bf16.mxu0 0
    %1831 = vmatpush1.bf16.msra.mxu0 0
    %1832 = vmatprep.subr.bf16.mxu0 0
    %1833 = vmatpush1.bf16.msra.mxu0 0
    %1834 = vmatprep.subr.bf16.mxu0 0
    %1835 = vmatpush1.bf16.msra.mxu0 0
    %1836 = vmatprep.subr.bf16.mxu0 0
    %1837 = vmatpush1.bf16.msra.mxu0 0
    %1838 = vmatprep.subr.bf16.mxu0 0
    %1839 = vmatpush1.bf16.msra.mxu0 0
    %1840 = vmatprep.subr.bf16.mxu0 0
    %1841 = vmatpush1.bf16.msra.mxu0 0
    %1842 = vmatprep.subr.bf16.mxu0 0
    %1843 = vmatpush1.bf16.msra.mxu0 0
    %1844 = vmatprep.mubr.bf16.mxu0 0
    %1845 = vmatmul.mubr.bf16.gmra.mrb[0].mxu0 %v1478
    %v1846 = vpop.f32.mrb[0].mxu0
    %v1847 = vadd.f32 %v1759, %v1846
    %v1848 = vpop.f32.mrb[0].mxu0
    %v1849 = vpop.f32.mrb[0].mxu0
    %v1850 = vpop.f32.mrb[0].mxu0
    %1851 = vdwg.mxu0
    %v1852 = vld [vmem:[#allocation2 + $0x8] sm:$0x80]
    %v1853 = vld [vmem:[#allocation2 + $0x10] sm:$0x1f]
    %vm1856 = vcmask 1040384
    %v1857 = vrot.slane %v1852, 7
    %v1858 = vrot.slane %v1853, 7
    %v1859 = vsel %vm1856, %v1857, %v1858
    %1861 = vmatprep.subr.bf16.mxu0 %v1103
    %1862 = vmatpush1.bf16.msra.mxu0 %v1102
    %1863 = vmatprep.subr.bf16.mxu0 %v1105
    %1864 = vmatpush1.bf16.msra.mxu0 %v1104
    %1865 = vmatprep.subr.bf16.mxu0 %v1107
    %1866 = vmatpush1.bf16.msra.mxu0 %v1106
    %1867 = vmatprep.subr.bf16.mxu0 %v1109
    %1868 = vmatpush1.bf16.msra.mxu0 %v1108
    %1869 = vmatprep.subr.bf16.mxu0 %v1111
    %1870 = vmatpush1.bf16.msra.mxu0 %v1110
    %1871 = vmatprep.subr.bf16.mxu0 %v1113
    %1872 = vmatpush1.bf16.msra.mxu0 %v1112
    %1873 = vmatprep.subr.bf16.mxu0 %v1115
    %1874 = vmatpush1.bf16.msra.mxu0 %v1114
    %1875 = vmatprep.subr.bf16.mxu0 %v1117
    %1876 = vmatpush1.bf16.msra.mxu0 %v1116
    %1877 = vmatprep.subr.bf16.mxu0 0
    %1878 = vmatpush1.bf16.msra.mxu0 0
    %1879 = vmatprep.subr.bf16.mxu0 0
    %1880 = vmatpush1.bf16.msra.mxu0 0
    %1881 = vmatprep.subr.bf16.mxu0 0
    %1882 = vmatpush1.bf16.msra.mxu0 0
    %1883 = vmatprep.subr.bf16.mxu0 0
    %1884 = vmatpush1.bf16.msra.mxu0 0
    %1885 = vmatprep.subr.bf16.mxu0 0
    %1886 = vmatpush1.bf16.msra.mxu0 0
    %1887 = vmatprep.subr.bf16.mxu0 0
    %1888 = vmatpush1.bf16.msra.mxu0 0
    %1889 = vmatprep.subr.bf16.mxu0 0
    %1890 = vmatpush1.bf16.msra.mxu0 0
    %1891 = vmatprep.subr.bf16.mxu0 0
    %1892 = vmatpush1.bf16.msra.mxu0 0
    %1893 = vmatprep.mubr.bf16.mxu0 0
    %1894 = vmatmul.mubr.bf16.gmra.mrb[0].mxu0 %v1859
    %v1895 = vpop.f32.mrb[0].mxu0
    %v1896 = vadd.f32 0.0, %v1895
    %v1897 = vpop.f32.mrb[0].mxu0
    %v1898 = vadd.f32 0.0, %v1897
    %v1899 = vpop.f32.mrb[0].mxu0
    %v1900 = vadd.f32 0.0, %v1899
    %v1901 = vpop.f32.mrb[0].mxu0
    %v1902 = vadd.f32 0.0, %v1901
    %1903 = vdwg.mxu0
    %1904 = vmatprep.subr.bf16.mxu0 %v1226
    %1905 = vmatpush1.bf16.msra.mxu0 %v1225
    %1906 = vmatprep.subr.bf16.mxu0 %v1228
    %1907 = vmatpush1.bf16.msra.mxu0 %v1227
    %1908 = vmatprep.subr.bf16.mxu0 %v1230
    %1909 = vmatpush1.bf16.msra.mxu0 %v1229
    %1910 = vmatprep.subr.bf16.mxu0 %v1232
    %1911 = vmatpush1.bf16.msra.mxu0 %v1231
    %1912 = vmatprep.subr.bf16.mxu0 %v1234
    %1913 = vmatpush1.bf16.msra.mxu0 %v1233
    %1914 = vmatprep.subr.bf16.mxu0 %v1236
    %1915 = vmatpush1.bf16.msra.mxu0 %v1235
    %1916 = vmatprep.subr.bf16.mxu0 %v1238
    %1917 = vmatpush1.bf16.msra.mxu0 %v1237
    %1918 = vmatprep.subr.bf16.mxu0 %v1240
    %1919 = vmatpush1.bf16.msra.mxu0 %v1239
    %1920 = vmatprep.subr.bf16.mxu0 0
    %1921 = vmatpush1.bf16.msra.mxu0 0
    %1922 = vmatprep.subr.bf16.mxu0 0
    %1923 = vmatpush1.bf16.msra.mxu0 0
    %1924 = vmatprep.subr.bf16.mxu0 0
    %1925 = vmatpush1.bf16.msra.mxu0 0
    %1926 = vmatprep.subr.bf16.mxu0 0
    %1927 = vmatpush1.bf16.msra.mxu0 0
    %1928 = vmatprep.subr.bf16.mxu0 0
    %1929 = vmatpush1.bf16.msra.mxu0 0
    %1930 = vmatprep.subr.bf16.mxu0 0
    %1931 = vmatpush1.bf16.msra.mxu0 0
    %1932 = vmatprep.subr.bf16.mxu0 0
    %1933 = vmatpush1.bf16.msra.mxu0 0
    %1934 = vmatprep.subr.bf16.mxu0 0
    %1935 = vmatpush1.bf16.msra.mxu0 0
    %1936 = vmatprep.mubr.bf16.mxu0 0
    %1937 = vmatmul.mubr.bf16.gmra.mrb[0].mxu0 %v1592
    %v1938 = vpop.f32.mrb[0].mxu0
    %v1939 = vadd.f32 %v1896, %v1938
    %v1940 = vpop.f32.mrb[0].mxu0
    %v1941 = vadd.f32 %v1898, %v1940
    %v1942 = vpop.f32.mrb[0].mxu0
    %v1943 = vadd.f32 %v1900, %v1942
    %v1944 = vpop.f32.mrb[0].mxu0
    %v1945 = vadd.f32 %v1902, %v1944
    %1946 = vdwg.mxu0
    %v1947 = vld [vmem:[#allocation2 + $0x10] sm:$0xfc]
    %v1949 = vrot.slane %v1947, 2
    %1951 = vmatprep.subr.bf16.mxu0 %v1375
    %1952 = vmatpush1.bf16.msra.mxu0 %v1374
    %1953 = vmatprep.subr.bf16.mxu0 %v1377
    %1954 = vmatpush1.bf16.msra.mxu0 %v1376
    %1955 = vmatprep.subr.bf16.mxu0 %v1379
    %1956 = vmatpush1.bf16.msra.mxu0 %v1378
    %1957 = vmatprep.subr.bf16.mxu0 %v1381
    %1958 = vmatpush1.bf16.msra.mxu0 %v1380
    %1959 = vmatprep.subr.bf16.mxu0 %v1383
    %1960 = vmatpush1.bf16.msra.mxu0 %v1382
    %1961 = vmatprep.subr.bf16.mxu0 %v1385
    %1962 = vmatpush1.bf16.msra.mxu0 %v1384
    %1963 = vmatprep.subr.bf16.mxu0 %v1387
    %1964 = vmatpush1.bf16.msra.mxu0 %v1386
    %1965 = vmatprep.subr.bf16.mxu0 %v1389
    %1966 = vmatpush1.bf16.msra.mxu0 %v1388
    %1967 = vmatprep.subr.bf16.mxu0 0
    %1968 = vmatpush1.bf16.msra.mxu0 0
    %1969 = vmatprep.subr.bf16.mxu0 0
    %1970 = vmatpush1.bf16.msra.mxu0 0
    %1971 = vmatprep.subr.bf16.mxu0 0
    %1972 = vmatpush1.bf16.msra.mxu0 0
    %1973 = vmatprep.subr.bf16.mxu0 0
    %1974 = vmatpush1.bf16.msra.mxu0 0
    %1975 = vmatprep.subr.bf16.mxu0 0
    %1976 = vmatpush1.bf16.msra.mxu0 0
    %1977 = vmatprep.subr.bf16.mxu0 0
    %1978 = vmatpush1.bf16.msra.mxu0 0
    %1979 = vmatprep.subr.bf16.mxu0 0
    %1980 = vmatpush1.bf16.msra.mxu0 0
    %1981 = vmatprep.subr.bf16.mxu0 0
    %1982 = vmatpush1.bf16.msra.mxu0 0
    %1983 = vmatprep.mubr.bf16.mxu0 0
    %1984 = vmatmul.mubr.bf16.gmra.mrb[0].mxu0 %v1949
    %v1985 = vpop.f32.mrb[0].mxu0
    %v1986 = vadd.f32 0.0, %v1985
    %v1987 = vpop.f32.mrb[0].mxu0
    %v1988 = vadd.f32 0.0, %v1987
    %v1989 = vpop.f32.mrb[0].mxu0
    %v1990 = vadd.f32 0.0, %v1989
    %v1991 = vpop.f32.mrb[0].mxu0
    %v1992 = vadd.f32 0.0, %v1991
    %1993 = vdwg.mxu0
    %v1994 = vadd.f32 %v1939, %v1986
    %v1995 = vadd.f32 %v1941, %v1988
    %v1996 = vadd.f32 %v1943, %v1990
    %v1997 = vadd.f32 %v1945, %v1992
    %v2002 = vrot.slane %v1994, 6
    %v2003 = vrot.slane %v1996, 6
    %v2004 = vsel %vm1457, %v2002, %v2003
    %v2005 = vrot.slane %v1995, 6
    %v2006 = vrot.slane %v1997, 6
    %v2007 = vsel %vm1457, %v2005, %v2006
    %v2010 = vmax.f32 %v1994, %v2004
    %v2011 = vmax.f32 %v1995, %v2007
    %v2012 = vmax.f32 %v2010, %v2011
    %v2013 = vadd.f32 %v2012, %v1474
    %v2014 = vmax.f32 %v2013, 0.0
    %v2015 = vpack.c.bf16 %v2014, %v2014
    %s2016 = scalar_lea.vmem %s5, 128
    %v2017 = vld [vmem:[%s2016] sm:$0xf]
    %v2018 = vld [vmem:[%s2016 + $0x4] sm:$0xf]
    %v2019 = vld [vmem:[%s2016 + $0x8] sm:$0xf]
    %v2020 = vld [vmem:[%s2016 + $0xc] sm:$0xf]
    %v2021 = vld [vmem:[%s2016 + $0x10] sm:$0xf]
    %v2022 = vld [vmem:[%s2016 + $0x14] sm:$0xf]
    %v2023 = vld [vmem:[%s2016 + $0x18] sm:$0xf]
    %v2024 = vld [vmem:[%s2016 + $0x1c] sm:$0xf]
    %v2025 = vld [vmem:[%s2016 + $0x20] sm:$0xf]
    %v2026 = vld [vmem:[%s2016 + $0x24] sm:$0xf]
    %v2027 = vld [vmem:[%s2016 + $0x28] sm:$0xf]
    %v2028 = vld [vmem:[%s2016 + $0x2c] sm:$0xf]
    %v2029 = vld [vmem:[%s2016 + $0x30] sm:$0xf]
    %v2030 = vld [vmem:[%s2016 + $0x34] sm:$0xf]
    %v2031 = vld [vmem:[%s2016 + $0x38] sm:$0xf]
    %v2032 = vld [vmem:[%s2016 + $0x3c] sm:$0xf]
    %v2049 = vunpack.c.l.b16 %v2017
    %v2050 = vunpack.c.l.b16 %v2018
    %v2051 = vunpack.c.l.b16 %v2019
    %v2052 = vunpack.c.l.b16 %v2020
    %v2053 = vunpack.c.l.b16 %v2021
    %v2054 = vunpack.c.l.b16 %v2022
    %v2055 = vunpack.c.l.b16 %v2023
    %v2056 = vunpack.c.l.b16 %v2024
    %v2057 = vunpack.c.l.b16 %v2025
    %v2058 = vunpack.c.l.b16 %v2026
    %v2059 = vunpack.c.l.b16 %v2027
    %v2060 = vunpack.c.l.b16 %v2028
    %v2061 = vunpack.c.l.b16 %v2029
    %v2062 = vunpack.c.l.b16 %v2030
    %v2063 = vunpack.c.l.b16 %v2031
    %v2064 = vunpack.c.l.b16 %v2032
    %v2065 = vpack.c.b16 %v2050, %v2049
    %v2066 = vpack.c.b16 %v2052, %v2051
    %v2067 = vpack.c.b16 %v2054, %v2053
    %v2068 = vpack.c.b16 %v2056, %v2055
    %v2069 = vpack.c.b16 %v2058, %v2057
    %v2070 = vpack.c.b16 %v2060, %v2059
    %v2071 = vpack.c.b16 %v2062, %v2061
    %v2072 = vpack.c.b16 %v2064, %v2063
    %2081 = vmatprep.subr.bf16.mxu0 0
    %2082 = vmatpush1.bf16.msra.mxu0 %v2065
    %2083 = vmatprep.subr.bf16.mxu0 0
    %2084 = vmatpush1.bf16.msra.mxu0 %v2066
    %2085 = vmatprep.subr.bf16.mxu0 0
    %2086 = vmatpush1.bf16.msra.mxu0 %v2067
    %2087 = vmatprep.subr.bf16.mxu0 0
    %2088 = vmatpush1.bf16.msra.mxu0 %v2068
    %2089 = vmatprep.subr.bf16.mxu0 0
    %2090 = vmatpush1.bf16.msra.mxu0 %v2069
    %2091 = vmatprep.subr.bf16.mxu0 0
    %2092 = vmatpush1.bf16.msra.mxu0 %v2070
    %2093 = vmatprep.subr.bf16.mxu0 0
    %2094 = vmatpush1.bf16.msra.mxu0 %v2071
    %2095 = vmatprep.subr.bf16.mxu0 0
    %2096 = vmatpush1.bf16.msra.mxu0 %v2072
    %2097 = vmatprep.subr.bf16.mxu0 0
    %2098 = vmatpush1.bf16.msra.mxu0 0
    %2099 = vmatprep.subr.bf16.mxu0 0
    %2100 = vmatpush1.bf16.msra.mxu0 0
    %2101 = vmatprep.subr.bf16.mxu0 0
    %2102 = vmatpush1.bf16.msra.mxu0 0
    %2103 = vmatprep.subr.bf16.mxu0 0
    %2104 = vmatpush1.bf16.msra.mxu0 0
    %2105 = vmatprep.subr.bf16.mxu0 0
    %2106 = vmatpush1.bf16.msra.mxu0 0
    %2107 = vmatprep.subr.bf16.mxu0 0
    %2108 = vmatpush1.bf16.msra.mxu0 0
    %2109 = vmatprep.subr.bf16.mxu0 0
    %2110 = vmatpush1.bf16.msra.mxu0 0
    %2111 = vmatprep.subr.bf16.mxu0 0
    %2112 = vmatpush1.bf16.msra.mxu0 0
    %2113 = vmatprep.mubr.bf16.mxu0 0
    %2114 = vmatmul.mubr.bf16.gmra.mrb[0].mxu0 %v2015
    %v2115 = vpop.f32.mrb[0].mxu0
    %v2116 = vadd.f32 0.0, %v2115
    %v2117 = vpop.f32.mrb[0].mxu0
    %v2118 = vpop.f32.mrb[0].mxu0
    %v2119 = vpop.f32.mrb[0].mxu0
    %2120 = vdwg.mxu0
    %v2121 = vadd.f32 %v1847, %v2116
    %v2122 = vld [vmem:[#allocation2 + $0x10] sm:$0xe0]
    %v2123 = vld [vmem:[#allocation2 + $0x18] sm:$0x7]
    %vm2126 = vcmask 1042432
    %v2127 = vrot.slane %v2122, 5
    %v2128 = vrot.slane %v2123, 5
    %v2129 = vsel %vm2126, %v2127, %v2128
    %2131 = vmatprep.subr.bf16.mxu0 %v1103
    %2132 = vmatpush1.bf16.msra.mxu0 %v1102
    %2133 = vmatprep.subr.bf16.mxu0 %v1105
    %2134 = vmatpush1.bf16.msra.mxu0 %v1104
    %2135 = vmatprep.subr.bf16.mxu0 %v1107
    %2136 = vmatpush1.bf16.msra.mxu0 %v1106
    %2137 = vmatprep.subr.bf16.mxu0 %v1109
    %2138 = vmatpush1.bf16.msra.mxu0 %v1108
    %2139 = vmatprep.subr.bf16.mxu0 %v1111
    %2140 = vmatpush1.bf16.msra.mxu0 %v1110
    %2141 = vmatprep.subr.bf16.mxu0 %v1113
    %2142 = vmatpush1.bf16.msra.mxu0 %v1112
    %2143 = vmatprep.subr.bf16.mxu0 %v1115
    %2144 = vmatpush1.bf16.msra.mxu0 %v1114
    %2145 = vmatprep.subr.bf16.mxu0 %v1117
    %2146 = vmatpush1.bf16.msra.mxu0 %v1116
    %2147 = vmatprep.subr.bf16.mxu0 0
    %2148 = vmatpush1.bf16.msra.mxu0 0
    %2149 = vmatprep.subr.bf16.mxu0 0
    %2150 = vmatpush1.bf16.msra.mxu0 0
    %2151 = vmatprep.subr.bf16.mxu0 0
    %2152 = vmatpush1.bf16.msra.mxu0 0
    %2153 = vmatprep.subr.bf16.mxu0 0
    %2154 = vmatpush1.bf16.msra.mxu0 0
    %2155 = vmatprep.subr.bf16.mxu0 0
    %2156 = vmatpush1.bf16.msra.mxu0 0
    %2157 = vmatprep.subr.bf16.mxu0 0
    %2158 = vmatpush1.bf16.msra.mxu0 0
    %2159 = vmatprep.subr.bf16.mxu0 0
    %2160 = vmatpush1.bf16.msra.mxu0 0
    %2161 = vmatprep.subr.bf16.mxu0 0
    %2162 = vmatpush1.bf16.msra.mxu0 0
    %2163 = vmatprep.mubr.bf16.mxu0 0
    %2164 = vmatmul.mubr.bf16.gmra.mrb[0].mxu0 %v2129
    %v2165 = vpop.f32.mrb[0].mxu0
    %v2166 = vadd.f32 0.0, %v2165
    %v2167 = vpop.f32.mrb[0].mxu0
    %v2168 = vadd.f32 0.0, %v2167
    %v2169 = vpop.f32.mrb[0].mxu0
    %v2170 = vadd.f32 0.0, %v2169
    %v2171 = vpop.f32.mrb[0].mxu0
    %v2172 = vadd.f32 0.0, %v2171
    %2173 = vdwg.mxu0
    %2174 = vmatprep.subr.bf16.mxu0 %v1226
    %2175 = vmatpush1.bf16.msra.mxu0 %v1225
    %2176 = vmatprep.subr.bf16.mxu0 %v1228
    %2177 = vmatpush1.bf16.msra.mxu0 %v1227
    %2178 = vmatprep.subr.bf16.mxu0 %v1230
    %2179 = vmatpush1.bf16.msra.mxu0 %v1229
    %2180 = vmatprep.subr.bf16.mxu0 %v1232
    %2181 = vmatpush1.bf16.msra.mxu0 %v1231
    %2182 = vmatprep.subr.bf16.mxu0 %v1234
    %2183 = vmatpush1.bf16.msra.mxu0 %v1233
    %2184 = vmatprep.subr.bf16.mxu0 %v1236
    %2185 = vmatpush1.bf16.msra.mxu0 %v1235
    %2186 = vmatprep.subr.bf16.mxu0 %v1238
    %2187 = vmatpush1.bf16.msra.mxu0 %v1237
    %2188 = vmatprep.subr.bf16.mxu0 %v1240
    %2189 = vmatpush1.bf16.msra.mxu0 %v1239
    %2190 = vmatprep.subr.bf16.mxu0 0
    %2191 = vmatpush1.bf16.msra.mxu0 0
    %2192 = vmatprep.subr.bf16.mxu0 0
    %2193 = vmatpush1.bf16.msra.mxu0 0
    %2194 = vmatprep.subr.bf16.mxu0 0
    %2195 = vmatpush1.bf16.msra.mxu0 0
    %2196 = vmatprep.subr.bf16.mxu0 0
    %2197 = vmatpush1.bf16.msra.mxu0 0
    %2198 = vmatprep.subr.bf16.mxu0 0
    %2199 = vmatpush1.bf16.msra.mxu0 0
    %2200 = vmatprep.subr.bf16.mxu0 0
    %2201 = vmatpush1.bf16.msra.mxu0 0
    %2202 = vmatprep.subr.bf16.mxu0 0
    %2203 = vmatpush1.bf16.msra.mxu0 0
    %2204 = vmatprep.subr.bf16.mxu0 0
    %2205 = vmatpush1.bf16.msra.mxu0 0
    %2206 = vmatprep.mubr.bf16.mxu0 0
    %2207 = vmatmul.mubr.bf16.gmra.mrb[0].mxu0 %v1949
    %v2208 = vpop.f32.mrb[0].mxu0
    %v2209 = vadd.f32 %v2166, %v2208
    %v2210 = vpop.f32.mrb[0].mxu0
    %v2211 = vadd.f32 %v2168, %v2210
    %v2212 = vpop.f32.mrb[0].mxu0
    %v2213 = vadd.f32 %v2170, %v2212
    %v2214 = vpop.f32.mrb[0].mxu0
    %v2215 = vadd.f32 %v2172, %v2214
    %2216 = vdwg.mxu0
    %v2217 = vld [vmem:[#allocation2 + $0x18] sm:$0x3f]
    %2218 = vmatprep.subr.bf16.mxu0 %v1375
    %2219 = vmatpush1.bf16.msra.mxu0 %v1374
    %2220 = vmatprep.subr.bf16.mxu0 %v1377
    %2221 = vmatpush1.bf16.msra.mxu0 %v1376
    %2222 = vmatprep.subr.bf16.mxu0 %v1379
    %2223 = vmatpush1.bf16.msra.mxu0 %v1378
    %2224 = vmatprep.subr.bf16.mxu0 %v1381
    %2225 = vmatpush1.bf16.msra.mxu0 %v1380
    %2226 = vmatprep.subr.bf16.mxu0 %v1383
    %2227 = vmatpush1.bf16.msra.mxu0 %v1382
    %2228 = vmatprep.subr.bf16.mxu0 %v1385
    %2229 = vmatpush1.bf16.msra.mxu0 %v1384
    %2230 = vmatprep.subr.bf16.mxu0 %v1387
    %2231 = vmatpush1.bf16.msra.mxu0 %v1386
    %2232 = vmatprep.subr.bf16.mxu0 %v1389
    %2233 = vmatpush1.bf16.msra.mxu0 %v1388
    %2234 = vmatprep.subr.bf16.mxu0 0
    %2235 = vmatpush1.bf16.msra.mxu0 0
    %2236 = vmatprep.subr.bf16.mxu0 0
    %2237 = vmatpush1.bf16.msra.mxu0 0
    %2238 = vmatprep.subr.bf16.mxu0 0
    %2239 = vmatpush1.bf16.msra.mxu0 0
    %2240 = vmatprep.subr.bf16.mxu0 0
    %2241 = vmatpush1.bf16.msra.mxu0 0
    %2242 = vmatprep.subr.bf16.mxu0 0
    %2243 = vmatpush1.bf16.msra.mxu0 0
    %2244 = vmatprep.subr.bf16.mxu0 0
    %2245 = vmatpush1.bf16.msra.mxu0 0
    %2246 = vmatprep.subr.bf16.mxu0 0
    %2247 = vmatpush1.bf16.msra.mxu0 0
    %2248 = vmatprep.subr.bf16.mxu0 0
    %2249 = vmatpush1.bf16.msra.mxu0 0
    %2250 = vmatprep.mubr.bf16.mxu0 0
    %2251 = vmatmul.mubr.bf16.gmra.mrb[0].mxu0 %v2217
    %v2252 = vpop.f32.mrb[0].mxu0
    %v2253 = vadd.f32 0.0, %v2252
    %v2254 = vpop.f32.mrb[0].mxu0
    %v2255 = vadd.f32 0.0, %v2254
    %v2256 = vpop.f32.mrb[0].mxu0
    %v2257 = vadd.f32 0.0, %v2256
    %v2258 = vpop.f32.mrb[0].mxu0
    %v2259 = vadd.f32 0.0, %v2258
    %2260 = vdwg.mxu0
    %v2261 = vadd.f32 %v2209, %v2253
    %v2262 = vadd.f32 %v2211, %v2255
    %v2263 = vadd.f32 %v2213, %v2257
    %v2264 = vadd.f32 %v2215, %v2259
    %v2269 = vrot.slane %v2261, 6
    %v2270 = vrot.slane %v2263, 6
    %v2271 = vsel %vm1457, %v2269, %v2270
    %v2272 = vrot.slane %v2262, 6
    %v2273 = vrot.slane %v2264, 6
    %v2274 = vsel %vm1457, %v2272, %v2273
    %v2277 = vmax.f32 %v2261, %v2271
    %v2278 = vmax.f32 %v2262, %v2274
    %v2279 = vmax.f32 %v2277, %v2278
    %v2280 = vadd.f32 %v2279, %v1474
    %v2281 = vmax.f32 %v2280, 0.0
    %v2282 = vpack.c.bf16 %v2281, %v2281
    %s2283 = scalar_lea.vmem %s5, 192
    %v2284 = vld [vmem:[%s2283] sm:$0xf]
    %v2285 = vld [vmem:[%s2283 + $0x4] sm:$0xf]
    %v2286 = vld [vmem:[%s2283 + $0x8] sm:$0xf]
    %v2287 = vld [vmem:[%s2283 + $0xc] sm:$0xf]
    %v2288 = vld [vmem:[%s2283 + $0x10] sm:$0xf]
    %v2289 = vld [vmem:[%s2283 + $0x14] sm:$0xf]
    %v2290 = vld [vmem:[%s2283 + $0x18] sm:$0xf]
    %v2291 = vld [vmem:[%s2283 + $0x1c] sm:$0xf]
    %v2292 = vld [vmem:[%s2283 + $0x20] sm:$0xf]
    %v2293 = vld [vmem:[%s2283 + $0x24] sm:$0xf]
    %v2294 = vld [vmem:[%s2283 + $0x28] sm:$0xf]
    %v2295 = vld [vmem:[%s2283 + $0x2c] sm:$0xf]
    %v2296 = vld [vmem:[%s2283 + $0x30] sm:$0xf]
    %v2297 = vld [vmem:[%s2283 + $0x34] sm:$0xf]
    %v2298 = vld [vmem:[%s2283 + $0x38] sm:$0xf]
    %v2299 = vld [vmem:[%s2283 + $0x3c] sm:$0xf]
    %v2316 = vunpack.c.l.b16 %v2284
    %v2317 = vunpack.c.l.b16 %v2285
    %v2318 = vunpack.c.l.b16 %v2286
    %v2319 = vunpack.c.l.b16 %v2287
    %v2320 = vunpack.c.l.b16 %v2288
    %v2321 = vunpack.c.l.b16 %v2289
    %v2322 = vunpack.c.l.b16 %v2290
    %v2323 = vunpack.c.l.b16 %v2291
    %v2324 = vunpack.c.l.b16 %v2292
    %v2325 = vunpack.c.l.b16 %v2293
    %v2326 = vunpack.c.l.b16 %v2294
    %v2327 = vunpack.c.l.b16 %v2295
    %v2328 = vunpack.c.l.b16 %v2296
    %v2329 = vunpack.c.l.b16 %v2297
    %v2330 = vunpack.c.l.b16 %v2298
    %v2331 = vunpack.c.l.b16 %v2299
    %v2332 = vpack.c.b16 %v2317, %v2316
    %v2333 = vpack.c.b16 %v2319, %v2318
    %v2334 = vpack.c.b16 %v2321, %v2320
    %v2335 = vpack.c.b16 %v2323, %v2322
    %v2336 = vpack.c.b16 %v2325, %v2324
    %v2337 = vpack.c.b16 %v2327, %v2326
    %v2338 = vpack.c.b16 %v2329, %v2328
    %v2339 = vpack.c.b16 %v2331, %v2330
    %2348 = vmatprep.subr.bf16.mxu0 0
    %2349 = vmatpush1.bf16.msra.mxu0 %v2332
    %2350 = vmatprep.subr.bf16.mxu0 0
    %2351 = vmatpush1.bf16.msra.mxu0 %v2333
    %2352 = vmatprep.subr.bf16.mxu0 0
    %2353 = vmatpush1.bf16.msra.mxu0 %v2334
    %2354 = vmatprep.subr.bf16.mxu0 0
    %2355 = vmatpush1.bf16.msra.mxu0 %v2335
    %2356 = vmatprep.subr.bf16.mxu0 0
    %2357 = vmatpush1.bf16.msra.mxu0 %v2336
    %2358 = vmatprep.subr.bf16.mxu0 0
    %2359 = vmatpush1.bf16.msra.mxu0 %v2337
    %2360 = vmatprep.subr.bf16.mxu0 0
    %2361 = vmatpush1.bf16.msra.mxu0 %v2338
    %2362 = vmatprep.subr.bf16.mxu0 0
    %2363 = vmatpush1.bf16.msra.mxu0 %v2339
    %2364 = vmatprep.subr.bf16.mxu0 0
    %2365 = vmatpush1.bf16.msra.mxu0 0
    %2366 = vmatprep.subr.bf16.mxu0 0
    %2367 = vmatpush1.bf16.msra.mxu0 0
    %2368 = vmatprep.subr.bf16.mxu0 0
    %2369 = vmatpush1.bf16.msra.mxu0 0
    %2370 = vmatprep.subr.bf16.mxu0 0
    %2371 = vmatpush1.bf16.msra.mxu0 0
    %2372 = vmatprep.subr.bf16.mxu0 0
    %2373 = vmatpush1.bf16.msra.mxu0 0
    %2374 = vmatprep.subr.bf16.mxu0 0
    %2375 = vmatpush1.bf16.msra.mxu0 0
    %2376 = vmatprep.subr.bf16.mxu0 0
    %2377 = vmatpush1.bf16.msra.mxu0 0
    %2378 = vmatprep.subr.bf16.mxu0 0
    %2379 = vmatpush1.bf16.msra.mxu0 0
    %2380 = vmatprep.mubr.bf16.mxu0 0
    %2381 = vmatmul.mubr.bf16.gmra.mrb[0].mxu0 %v2282
    %v2382 = vpop.f32.mrb[0].mxu0
    %v2383 = vadd.f32 0.0, %v2382
    %v2384 = vpop.f32.mrb[0].mxu0
    %v2385 = vpop.f32.mrb[0].mxu0
    %v2386 = vpop.f32.mrb[0].mxu0
    %2387 = vdwg.mxu0
    %v2388 = vadd.f32 %v2121, %v2383
    %v2389 = vld [vmem:[%s6] sm:$0x1]
    %v2391 = vlaneseq
    %v2392 = vshrl.u32 %v2391, 7
    %v2393 = vsub.s32 0, %v2392
    %v2394 = vrot.slane %v2389, %v2393
    %v2396 = vadd.f32 %v2388, %v2394
    %v2397 = vmax.f32 %v2396, 0.0
    %v2398 = vpack.c.bf16 %v2397, %v2397
    %v2399 = vld [vmem:[%s7] sm:$0xf]
    %v2400 = vld [vmem:[%s7 + $0x4] sm:$0xf]
    %v2401 = vld [vmem:[%s7 + $0x8] sm:$0xf]
    %v2402 = vld [vmem:[%s7 + $0xc] sm:$0xf]
    %v2403 = vld [vmem:[%s7 + $0x10] sm:$0xf]
    %v2404 = vld [vmem:[%s7 + $0x14] sm:$0xf]
    %v2405 = vld [vmem:[%s7 + $0x18] sm:$0xf]
    %v2406 = vld [vmem:[%s7 + $0x1c] sm:$0xf]
    %v2407 = vld [vmem:[%s7 + $0x20] sm:$0xf]
    %v2408 = vld [vmem:[%s7 + $0x24] sm:$0xf]
    %v2409 = vld [vmem:[%s7 + $0x28] sm:$0xf]
    %v2410 = vld [vmem:[%s7 + $0x2c] sm:$0xf]
    %v2411 = vld [vmem:[%s7 + $0x30] sm:$0xf]
    %v2412 = vld [vmem:[%s7 + $0x34] sm:$0xf]
    %v2413 = vld [vmem:[%s7 + $0x38] sm:$0xf]
    %v2414 = vld [vmem:[%s7 + $0x3c] sm:$0xf]
    %v2415 = vld [vmem:[%s8] sm:$0x1]
    %v2417 = vlaneseq
    %v2418 = vshrl.u32 %v2417, 7
    %v2419 = vsub.s32 0, %v2418
    %v2420 = vrot.slane %v2415, %v2419
    %v2438 = vunpack.c.l.b16 %v2399
    %v2439 = vunpack.c.l.b16 %v2400
    %v2440 = vunpack.c.l.b16 %v2401
    %v2441 = vunpack.c.l.b16 %v2402
    %v2442 = vunpack.c.l.b16 %v2403
    %v2443 = vunpack.c.l.b16 %v2404
    %v2444 = vunpack.c.l.b16 %v2405
    %v2445 = vunpack.c.l.b16 %v2406
    %v2446 = vunpack.c.l.b16 %v2407
    %v2447 = vunpack.c.l.b16 %v2408
    %v2448 = vunpack.c.l.b16 %v2409
    %v2449 = vunpack.c.l.b16 %v2410
    %v2450 = vunpack.c.l.b16 %v2411
    %v2451 = vunpack.c.l.b16 %v2412
    %v2452 = vunpack.c.l.b16 %v2413
    %v2453 = vunpack.c.l.b16 %v2414
    %v2454 = vpack.c.b16 %v2439, %v2438
    %v2455 = vpack.c.b16 %v2441, %v2440
    %v2456 = vpack.c.b16 %v2443, %v2442
    %v2457 = vpack.c.b16 %v2445, %v2444
    %v2458 = vpack.c.b16 %v2447, %v2446
    %v2459 = vpack.c.b16 %v2449, %v2448
    %v2460 = vpack.c.b16 %v2451, %v2450
    %v2461 = vpack.c.b16 %v2453, %v2452
    %2470 = vmatprep.subr.bf16.mxu0 0
    %2471 = vmatpush1.bf16.msra.mxu0 %v2454
    %2472 = vmatprep.subr.bf16.mxu0 0
    %2473 = vmatpush1.bf16.msra.mxu0 %v2455
    %2474 = vmatprep.subr.bf16.mxu0 0
    %2475 = vmatpush1.bf16.msra.mxu0 %v2456
    %2476 = vmatprep.subr.bf16.mxu0 0
    %2477 = vmatpush1.bf16.msra.mxu0 %v2457
    %2478 = vmatprep.subr.bf16.mxu0 0
    %2479 = vmatpush1.bf16.msra.mxu0 %v2458
    %2480 = vmatprep.subr.bf16.mxu0 0
    %2481 = vmatpush1.bf16.msra.mxu0 %v2459
    %2482 = vmatprep.subr.bf16.mxu0 0
    %2483 = vmatpush1.bf16.msra.mxu0 %v2460
    %2484 = vmatprep.subr.bf16.mxu0 0
    %2485 = vmatpush1.bf16.msra.mxu0 %v2461
    %2486 = vmatprep.subr.bf16.mxu0 0
    %2487 = vmatpush1.bf16.msra.mxu0 0
    %2488 = vmatprep.subr.bf16.mxu0 0
    %2489 = vmatpush1.bf16.msra.mxu0 0
    %2490 = vmatprep.subr.bf16.mxu0 0
    %2491 = vmatpush1.bf16.msra.mxu0 0
    %2492 = vmatprep.subr.bf16.mxu0 0
    %2493 = vmatpush1.bf16.msra.mxu0 0
    %2494 = vmatprep.subr.bf16.mxu0 0
    %2495 = vmatpush1.bf16.msra.mxu0 0
    %2496 = vmatprep.subr.bf16.mxu0 0
    %2497 = vmatpush1.bf16.msra.mxu0 0
    %2498 = vmatprep.subr.bf16.mxu0 0
    %2499 = vmatpush1.bf16.msra.mxu0 0
    %2500 = vmatprep.subr.bf16.mxu0 0
    %2501 = vmatpush1.bf16.msra.mxu0 0
    %2502 = vmatprep.mubr.bf16.mxu0 0
    %2503 = vmatmul.mubr.bf16.gmra.mrb[0].mxu0 %v2398
    %v2504 = vpop.f32.mrb[0].mxu0
    %v2505 = vadd.f32 %v2420, %v2504
    %v2506 = vpop.f32.mrb[0].mxu0
    %v2507 = vpop.f32.mrb[0].mxu0
    %v2508 = vpop.f32.mrb[0].mxu0
    %2509 = vdwg.mxu0
    %v2510 = vmax.f32 %v2505, 0.0
    %2511 = vst [vmem:[%s11] sm:$0x3f] %v2510
    %vm2512 = vcmask 1042432
    %v2513 = vsel %vm2512, %v2510, -inf
    %v2514 = vrot.slane %v2513, 4
    %v2515 = vmax.f32 %v2513, %v2514
    %v2516 = vrot.slane %v2515, 2
    %v2517 = vmax.f32 %v2515, %v2516
    %v2518 = vrot.slane %v2517, 1
    %v2519 = vmax.f32 %v2517, %v2518
    %vm2520 = vcmask 1045507
    %v2521 = vsel %vm2520, %v2510, -inf
    %v2522 = vrot.slane %v2521, 4
    %v2523 = vmax.f32 %v2521, %v2522
    %v2524 = vrot.slane %v2523, 2
    %v2525 = vmax.f32 %v2523, %v2524
    %v2526 = vrot.slane %v2525, 1
    %v2527 = vmax.f32 %v2525, %v2526
    %vm2528 = vcmask 1040384
    %v2529 = vsel %vm2528, %v2519, %v2527
    %2530 = vst [vmem:[#allocation3] sm:$0x3] %v2529
    %v2531 = vpack.c.bf16 %v2529, %v2529
    %v2532 = vld [vmem:[%s9] sm:$0xf]
    %v2533 = vld [vmem:[%s9 + $0x4] sm:$0xf]
    %v2534 = vld [vmem:[%s9 + $0x8] sm:$0xf]
    %v2535 = vld [vmem:[%s9 + $0xc] sm:$0xf]
    %v2536 = vld [vmem:[%s9 + $0x10] sm:$0xf]
    %v2537 = vld [vmem:[%s9 + $0x14] sm:$0xf]
    %v2538 = vld [vmem:[%s9 + $0x18] sm:$0xf]
    %v2539 = vld [vmem:[%s9 + $0x1c] sm:$0xf]
    %v2540 = vld [vmem:[%s9 + $0x20] sm:$0xf]
    %v2541 = vld [vmem:[%s9 + $0x24] sm:$0xf]
    %v2542 = vld [vmem:[%s9 + $0x28] sm:$0xf]
    %v2543 = vld [vmem:[%s9 + $0x2c] sm:$0xf]
    %v2544 = vld [vmem:[%s9 + $0x30] sm:$0xf]
    %v2545 = vld [vmem:[%s9 + $0x34] sm:$0xf]
    %v2546 = vld [vmem:[%s9 + $0x38] sm:$0xf]
    %v2547 = vld [vmem:[%s9 + $0x3c] sm:$0xf]
    %v2548 = vld [vmem:[%s10] sm:$0x1]
    %v2550 = vlaneseq
    %v2551 = vshrl.u32 %v2550, 7
    %v2552 = vsub.s32 0, %v2551
    %v2553 = vrot.slane %v2548, %v2552
    %v2571 = vunpack.c.l.b16 %v2532
    %v2572 = vunpack.c.l.b16 %v2533
    %v2573 = vunpack.c.l.b16 %v2534
    %v2574 = vunpack.c.l.b16 %v2535
    %v2575 = vunpack.c.l.b16 %v2536
    %v2576 = vunpack.c.l.b16 %v2537
    %v2577 = vunpack.c.l.b16 %v2538
    %v2578 = vunpack.c.l.b16 %v2539
    %v2579 = vunpack.c.l.b16 %v2540
    %v2580 = vunpack.c.l.b16 %v2541
    %v2581 = vunpack.c.l.b16 %v2542
    %v2582 = vunpack.c.l.b16 %v2543
    %v2583 = vunpack.c.l.b16 %v2544
    %v2584 = vunpack.c.l.b16 %v2545
    %v2585 = vunpack.c.l.b16 %v2546
    %v2586 = vunpack.c.l.b16 %v2547
    %v2587 = vpack.c.b16 %v2572, %v2571
    %v2588 = vpack.c.b16 %v2574, %v2573
    %v2589 = vpack.c.b16 %v2576, %v2575
    %v2590 = vpack.c.b16 %v2578, %v2577
    %v2591 = vpack.c.b16 %v2580, %v2579
    %v2592 = vpack.c.b16 %v2582, %v2581
    %v2593 = vpack.c.b16 %v2584, %v2583
    %v2594 = vpack.c.b16 %v2586, %v2585
    %2603 = vmatprep.subr.bf16.mxu0 0
    %2604 = vmatpush1.bf16.msra.mxu0 %v2587
    %2605 = vmatprep.subr.bf16.mxu0 0
    %2606 = vmatpush1.bf16.msra.mxu0 %v2588
    %2607 = vmatprep.subr.bf16.mxu0 0
    %2608 = vmatpush1.bf16.msra.mxu0 %v2589
    %2609 = vmatprep.subr.bf16.mxu0 0
    %2610 = vmatpush1.bf16.msra.mxu0 %v2590
    %2611 = vmatprep.subr.bf16.mxu0 0
    %2612 = vmatpush1.bf16.msra.mxu0 %v2591
    %2613 = vmatprep.subr.bf16.mxu0 0
    %2614 = vmatpush1.bf16.msra.mxu0 %v2592
    %2615 = vmatprep.subr.bf16.mxu0 0
    %2616 = vmatpush1.bf16.msra.mxu0 %v2593
    %2617 = vmatprep.subr.bf16.mxu0 0
    %2618 = vmatpush1.bf16.msra.mxu0 %v2594
    %2619 = vmatprep.subr.bf16.mxu0 0
    %2620 = vmatpush1.bf16.msra.mxu0 0
    %2621 = vmatprep.subr.bf16.mxu0 0
    %2622 = vmatpush1.bf16.msra.mxu0 0
    %2623 = vmatprep.subr.bf16.mxu0 0
    %2624 = vmatpush1.bf16.msra.mxu0 0
    %2625 = vmatprep.subr.bf16.mxu0 0
    %2626 = vmatpush1.bf16.msra.mxu0 0
    %2627 = vmatprep.subr.bf16.mxu0 0
    %2628 = vmatpush1.bf16.msra.mxu0 0
    %2629 = vmatprep.subr.bf16.mxu0 0
    %2630 = vmatpush1.bf16.msra.mxu0 0
    %2631 = vmatprep.subr.bf16.mxu0 0
    %2632 = vmatpush1.bf16.msra.mxu0 0
    %2633 = vmatprep.subr.bf16.mxu0 0
    %2634 = vmatpush1.bf16.msra.mxu0 0
    %2635 = vmatprep.mubr.bf16.mxu0 0
    %2636 = vmatmul.mubr.bf16.gmra.mrb[0].mxu0 %v2531
    %v2637 = vpop.f32.mrb[0].mxu0
    %v2638 = vadd.f32 %v2553, %v2637
    %v2639 = vpop.f32.mrb[0].mxu0
    %v2640 = vpop.f32.mrb[0].mxu0
    %v2641 = vpop.f32.mrb[0].mxu0
    %2642 = vdwg.mxu0
    %2643 = vst [vmem:[#allocation5] sm:$0x3] %v2638
    // Predicated region
    $region46: #{mvcnn_forward.1} parent=1 // pred_check
      _
    $region47: #{mvcnn_forward.1} parent=1 // pred_check_branch
      %2645 = sbr.rel (0) target = $region49
    $region48: #{mvcnn_forward.1} parent=1 // pred_region
      _
    $region49: #{mvcnn_forward.1} parent=1 // pred_fallthru
      _
    // Predicated region
    $region50: #{mvcnn_forward.1} parent=1 // pred_check
      _
    $region51: #{mvcnn_forward.1} parent=1 // pred_check_branch
      %2647 = sbr.rel (0) target = $region53
    $region52: #{mvcnn_forward.1} parent=1 // pred_region
      %s2649 = ssub.s32 32, 32
      %2650 = vsyncadd [#allocation4], %s2649
      %s2652 = sshll.u32 [#allocation3], 4
      %s2653 = int_to_ptr.vmem [resolvable:$true] %s2652
      %2655 = dma.vmem_to_hbm [thread:$0]  %s2653, 32, %s12, [#allocation4]
    $region53: #{mvcnn_forward.1} parent=1 // pred_fallthru
      _
    // Predicated region
    $region54: #{mvcnn_forward.1} parent=1 // pred_check
      _
    $region55: #{mvcnn_forward.1} parent=1 // pred_check_branch
      %2657 = sbr.rel (0) target = $region57
    $region56: #{mvcnn_forward.1} parent=1 // pred_region
      %s2659 = ssub.s32 32, 32
      %2660 = vsyncadd [#allocation6], %s2659
      %s2662 = sshll.u32 [#allocation5], 4
      %s2663 = int_to_ptr.vmem [resolvable:$true] %s2662
      %2665 = dma.vmem_to_hbm [thread:$0]  %s2663, 32, %s13, [#allocation6]
    $region57: #{mvcnn_forward.1} parent=1 // pred_fallthru
      _
    // Predicated region
    $region58: #{mvcnn_forward.1} parent=1 // pred_check
      _
    $region59: #{mvcnn_forward.1} parent=1 // pred_check_branch
      %2667 = sbr.rel (0) target = $region61
    $region60: #{mvcnn_forward.1} parent=1 // pred_region
      _
    $region61: #{mvcnn_forward.1} parent=1 // pred_fallthru
      _
    // Predicated region
    $region62: #{mvcnn_forward.1} parent=1 // pred_check
      _
    $region63: #{mvcnn_forward.1} parent=1 // pred_check_branch
      %2669 = sbr.rel (0) target = $region65
    $region64: #{mvcnn_forward.1} parent=1 // pred_region
      %2670 = dma.done [#allocation4], 32
    $region65: #{mvcnn_forward.1} parent=1 // pred_fallthru
      _
    // Predicated region
    $region66: #{mvcnn_forward.1} parent=1 // pred_check
      _
    $region67: #{mvcnn_forward.1} parent=1 // pred_check_branch
      %2672 = sbr.rel (0) target = $region69
    $region68: #{mvcnn_forward.1} parent=1 // pred_region
      %2673 = dma.done [#allocation6], 32
    $region69: #{mvcnn_forward.1} parent=1 // pred_fallthru
      _
    %2674 = vsyncpa [#allocation4], 1
    %2675 = vsyncpa [#allocation6], 1

</llo_original>
